<compile_context>
chip_gen: v6e
topology: v6e:2x2x1
jax: 0.10.0
libtpu: 0.0.40
codegen_flags: <defaults>
</compile_context>

<pallas_src>
import jax
import jax.numpy as jnp
from functools import partial
from jax.experimental import pallas as pl
from jax.experimental.pallas import tpu as pltpu


# =============================================================================
# Kernel 1: text_hidden_fcs (Linear-ReLU-Linear, Dropout p=0.0 == identity),
# hoisted out of the per-image grid: ONE batched matmul over all gathered [SEG]
# rows.  bf16 MXU operands, f32 accumulation, bf16 embeddings out.
# =============================================================================
def _text_fc_kernel(x_ref, w1_ref, b1_ref, w2_ref, b2_ref, out_ref):
    x = x_ref[...]                                                     # [tm, H] bf16
    h = jnp.dot(x, w1_ref[...], preferred_element_type=jnp.float32) + b1_ref[...]
    h = jnp.maximum(h, 0.0)
    e = jnp.dot(h.astype(jnp.bfloat16), w2_ref[...],
                preferred_element_type=jnp.float32) + b2_ref[...]       # [tm, C] f32
    out_ref[...] = e.astype(out_ref.dtype)                             # bf16 embeddings


def text_fc_project(seg_rows, w1, b1, w2, b2):
    """seg_rows: [M, H] bf16 (all gathered [SEG] rows, batch-flattened) -> [M, C] bf16."""
    M, H = seg_rows.shape
    C = w2.shape[1]
    tm = M
    # TODO(synk): at production sizes (H~4096, large M) add an M grid axis and a trailing
    # 'arbitrary' K axis with an f32 accumulator (bias+ReLU gated by pl.when on the last k),
    # or keep the weights resident with pipeline_mode=pl.Buffered(1) so the 32 MiB bf16 w1
    # is not double-buffered (needed to fit v7x's 64 MiB VMEM).  At these shapes one block
    # per operand fits trivially.
    grid_spec = pltpu.PrefetchScalarGridSpec(
        num_scalar_prefetch=0,
        grid=(M // tm,),
        in_specs=[
            pl.BlockSpec((tm, H), lambda m: (m, 0)),
            pl.BlockSpec((H, H), lambda m: (0, 0)),     # w1 (constant block -> resident)
            pl.BlockSpec((1, H), lambda m: (0, 0)),     # b1
            pl.BlockSpec((H, C), lambda m: (0, 0)),     # w2
            pl.BlockSpec((1, C), lambda m: (0, 0)),     # b2
        ],
        out_specs=pl.BlockSpec((tm, C), lambda m: (m, 0)),
    )
    return pl.pallas_call(
        _text_fc_kernel,
        out_shape=jax.ShapeDtypeStruct((M, C), jnp.bfloat16),
        grid_spec=grid_spec,
        compiler_params=pltpu.CompilerParams(
            dimension_semantics=("parallel",),
            vmem_limit_bytes=48 * 1024 * 1024),
    )(seg_rows, w1, b1, w2, b2)


# =============================================================================
# Kernel 2: mask head ('nc,c(hw)->n(hw)') + fused sigmoid-CE + dice losses,
# HW-tiled: grid = (num_images, HW // tile_hw), reduction axis last ('arbitrary').
# Per-row partial sums live in small f32 VMEM scratch; finalize on the last HW
# tile writes a lane-dense [1,128] per-image loss row.  gt is streamed as bf16,
# pred-mask logits are written back as bf16 with padded rows zeroed.
# =============================================================================
def _mask_loss_kernel(nvalid_ref, gtcnt_ref,                     # scalar prefetch (SMEM)
                      emb_ref, feat_ref, gt_ref,
                      pm_ref, loss_ref,
                      bce_acc, pt_acc, p_acc, t_acc,
                      *, hw_total):
    i = pl.program_id(0)
    hw = pl.program_id(1)
    n_hw = pl.num_programs(1)
    max_n = emb_ref.shape[1]
    n = nvalid_ref[i]                       # number of valid [SEG] queries for image i
    gtc = gtcnt_ref[i]                      # number of gt masks for image i

    @pl.when(hw == 0)
    def _():
        bce_acc[...] = jnp.zeros_like(bce_acc)
        pt_acc[...] = jnp.zeros_like(pt_acc)
        p_acc[...] = jnp.zeros_like(p_acc)
        t_acc[...] = jnp.zeros_like(t_acc)

    # ---- mask head on this HW tile (bf16 MXU operands, f32 accumulation).
    # TODO(synk): SAM prompt encoder / two-way-transformer mask decoder /
    # postprocess_masks (bilinear resize) are not translated; this is the final
    # hypernetwork dot-product on synthetic upscaled features at low resolution.
    logits = jnp.dot(emb_ref[0], feat_ref[0],
                     preferred_element_type=jnp.float32)          # [max_n, thw] f32

    row_valid = jax.lax.broadcasted_iota(jnp.int32, (max_n, 1), 0) < n
    rv_f = row_valid.astype(jnp.float32)

    # bf16 writeback, padded query rows zeroed (halves the pm HBM write stream).
    pm_ref[0] = jnp.where(row_valid, logits, 0.0).astype(pm_ref.dtype)

    # ---- fused sigmoid_ce_loss + dice_loss partial sums (f32, exact sigmoid).
    # TODO(synk): on v6e/v7x the elementwise part could run in bf16 (packed EUP/VPU);
    # kept f32 here so the same kernel is correct/fast on v5e too.
    t = gt_ref[0].astype(jnp.float32)                              # 0/1 exact from bf16
    z = jnp.exp(-jnp.abs(logits))
    bce = jnp.maximum(logits, 0.0) - logits * t + jnp.log1p(z)
    inv = 1.0 / (1.0 + z)
    p = jnp.where(logits >= 0.0, inv, z * inv)                     # sigmoid(logits)

    bce_acc[...] += jnp.sum(bce, axis=-1, keepdims=True)
    pt_acc[...] += jnp.sum(p * t, axis=-1, keepdims=True)
    p_acc[...] += jnp.sum(p, axis=-1, keepdims=True)
    t_acc[...] += jnp.sum(t, axis=-1, keepdims=True)

    @pl.when(hw == n_hw - 1)
    def _():
        scale, eps = 1000.0, 1e-6
        bce_per = bce_acc[...] * (1.0 / hw_total)                  # mean over HW
        dice_per = 1.0 - (2.0 * (pt_acc[...] / scale) + eps) / (
            p_acc[...] / scale + t_acc[...] / scale + eps)
        bce_sum = jnp.sum(bce_per * rv_f)
        dice_sum = jnp.sum(dice_per * rv_f)

        n_f = n.astype(jnp.float32)
        factor = n_f / (n_f + 1e-8)          # == (sum / (n + 1e-8)) * n   in the reference
        match = gtc == n                      # reference skips image on count mismatch ...
        match_f = match.astype(jnp.float32)
        bce_img = bce_sum * factor * match_f
        dice_img = dice_sum * factor * match_f
        nmask_img = jnp.where(match, n_f, 1.0)   # ... but still adds 1 to num_masks

        lane = jax.lax.broadcasted_iota(jnp.int32, (1, 128), 1)
        loss_ref[0] = jnp.where(lane == 0, bce_img,
                      jnp.where(lane == 1, dice_img,
                      jnp.where(lane == 2, nmask_img, 0.0)))        # lane-dense [1,128]


def seg_mask_losses(n_valid, gt_counts, emb, feats, gt, *, tile_hw=None):
    """emb: [num_images, max_n, C] bf16; feats: [num_images, C, HW] bf16; gt: bf16."""
    num_images, max_n, C = emb.shape
    HW = feats.shape[-1]
    if tile_hw is None:
        tile_hw = HW
        for cand in (8192, 4096, 2048, 1024, 512, 256, 128):
            if HW % cand == 0:
                tile_hw = cand
                break
    assert HW % tile_hw == 0
    n_hw = HW // tile_hw

    grid_spec = pltpu.PrefetchScalarGridSpec(
        num_scalar_prefetch=2,
        grid=(num_images, n_hw),                       # reduction (HW) axis last
        in_specs=[
            pl.BlockSpec((1, max_n, C), lambda i, h, nv, gc: (i, 0, 0)),       # embeddings
            pl.BlockSpec((1, C, tile_hw), lambda i, h, nv, gc: (i, 0, h)),     # mask features
            pl.BlockSpec((1, max_n, tile_hw), lambda i, h, nv, gc: (i, 0, h)), # gt (bf16)
        ],
        out_specs=(
            pl.BlockSpec((1, max_n, tile_hw), lambda i, h, nv, gc: (i, 0, h)), # pm (bf16)
            pl.BlockSpec((1, 1, 128), lambda i, h, nv, gc: (i, 0, 0)),         # loss row
        ),
        scratch_shapes=[pltpu.VMEM((max_n, 1), jnp.float32)] * 4,
    )
    return pl.pallas_call(
        partial(_mask_loss_kernel, hw_total=float(HW)),
        out_shape=(jax.ShapeDtypeStruct((num_images, max_n, HW), jnp.bfloat16),
                   jax.ShapeDtypeStruct((num_images, 1, 128), jnp.float32)),
        grid_spec=grid_spec,
        compiler_params=pltpu.CompilerParams(
            # images independent (v7x megacore); HW is a resident-accumulator reduction.
            dimension_semantics=("parallel", "arbitrary"),
            # TODO(synk): per-generation sizing — v5e/v6e can go to 96+ MiB for bigger
            # HW tiles / deeper buffering, v7x must stay <= ~48 MiB (64 MiB physical).
            vmem_limit_bytes=48 * 1024 * 1024),
    )(n_valid, gt_counts, emb, feats, gt)


# =============================================================================
# Kernel 3: streamed shifted token cross-entropy (stand-in for Qwen2.5-VL's
# output.loss).  grid = (row_tiles, vocab_tiles); online logsumexp in f32 VMEM
# scratch over bf16 logits tiles; per-row-tile lane-dense [1,128] output row
# (lane 0 = sum of nll over valid rows, lane 1 = valid-row count).
# =============================================================================
def _shifted_ce_kernel(labels_ref, logits_ref, out_ref, m_acc, l_acc, lab_acc):
    v = pl.program_id(1)
    n_v = pl.num_programs(1)
    tr, tv = logits_ref.shape

    @pl.when(v == 0)
    def _():
        m_acc[...] = jnp.full_like(m_acc, -jnp.inf)
        l_acc[...] = jnp.zeros_like(l_acc)
        lab_acc[...] = jnp.zeros_like(lab_acc)

    x = logits_ref[...].astype(jnp.float32)                        # [tr, tv]
    labels = labels_ref[...]                                       # [tr, 1] int32

    m_old = m_acc[...]
    m_new = jnp.maximum(m_old, jnp.max(x, axis=-1, keepdims=True))
    l_acc[...] = l_acc[...] * jnp.exp(m_old - m_new) + jnp.sum(
        jnp.exp(x - m_new), axis=-1, keepdims=True)
    m_acc[...] = m_new

    lane = jax.lax.broadcasted_iota(jnp.int32, (tr, tv), 1) + v * tv
    lab_acc[...] += jnp.sum(jnp.where(lane == labels, x, 0.0), axis=-1, keepdims=True)

    @pl.when(v == n_v - 1)
    def _():
        nll = (m_acc[...] + jnp.log(l_acc[...])) - lab_acc[...]
        valid = (labels != -100).astype(jnp.float32)
        nll_sum = jnp.sum(nll * valid)
        cnt = jnp.sum(valid)
        lane_o = jax.lax.broadcasted_iota(jnp.int32, (1, 128), 1)
        out_ref[0] = jnp.where(lane_o == 0, nll_sum,
                     jnp.where(lane_o == 1, cnt, 0.0))


def shifted_ce_loss(logits, labels):
    """Shifted CE with ignore_index=-100, V-tiled (no materialized log_softmax).

    TODO(synk): the full Qwen2.5-VL forward (output.logits / output.loss) has no Pallas
    translation; this streams the synthetic stand-in logits instead.
    """
    B, S, V = logits.shape
    shift_logits = logits[:, :-1, :].reshape(-1, V).astype(jnp.bfloat16)
    shift_labels = labels[:, 1:].reshape(-1).astype(jnp.int32)
    T = shift_logits.shape[0]
    tr = 16                                          # bf16 sublane-packing granularity
    T_pad = ((T + tr - 1) // tr) * tr
    tv = 128 if V % 128 == 0 else V
    lg = jnp.pad(shift_logits, ((0, T_pad - T), (0, 0)))
    lb = jnp.pad(shift_labels, (0, T_pad - T), constant_values=-100).reshape(-1, 1)

    grid_spec = pltpu.PrefetchScalarGridSpec(
        num_scalar_prefetch=0,
        grid=(T_pad // tr, V // tv),
        in_specs=[
            pl.BlockSpec((tr, 1), lambda r, v: (r, 0)),
            pl.BlockSpec((tr, tv), lambda r, v: (r, v)),
        ],
        out_specs=pl.BlockSpec((1, 1, 128), lambda r, v: (r, 0, 0)),
        scratch_shapes=[pltpu.VMEM((tr, 1), jnp.float32)] * 3,
    )
    out = pl.pallas_call(
        _shifted_ce_kernel,
        out_shape=jax.ShapeDtypeStruct((T_pad // tr, 1, 128), jnp.float32),
        grid_spec=grid_spec,
        compiler_params=pltpu.CompilerParams(
            dimension_semantics=("parallel", "arbitrary"),
            vmem_limit_bytes=48 * 1024 * 1024),
    )(lb, lg)
    totals = jnp.sum(out[:, 0, :], axis=0)
    return totals[0] / jnp.maximum(totals[1], 1.0)


# =============================================================================
# Forward: compact [SEG] gather -> hoisted FC projection -> fused mask/loss
# kernel -> loss composition.  Fully jittable; no host syncs, no full-tensor
# scatter / f32 copies of the hidden states.
# =============================================================================
@partial(jax.jit, static_argnames=("max_n", "tile_hw"))
def model_forward(params, output_hidden_states, input_ids, labels, logits,
                  mask_features, offset, gt_padded, gt_counts,
                  seg_token_idx, ce_w, bce_w, dice_w, max_n=16, tile_hw=None):
    B, S, H = output_hidden_states.shape
    num_images = offset.shape[0] - 1
    HW = mask_features.shape[-1]
    Hm = int(round(HW ** 0.5))

    # ----- compact [SEG] gather: only num_images*max_n rows are ever gathered -----
    seg_mask = input_ids == seg_token_idx
    counts = seg_mask.astype(jnp.int32).sum(-1)
    seg_off = jnp.concatenate(
        [jnp.zeros((1,), jnp.int32), jnp.cumsum(counts).astype(jnp.int32)])
    img_off = seg_off[offset]                                     # [num_images + 1]
    # TODO(synk): images with more than max_n [SEG] tokens are clipped to max_n.
    n_valid = jnp.minimum(img_off[1:] - img_off[:-1], max_n).astype(jnp.int32)

    total_cap = num_images * max_n
    flat_mask = seg_mask.reshape(-1)
    seg_pos = jnp.flatnonzero(flat_mask, size=total_cap, fill_value=0).astype(jnp.int32)
    slot = jnp.arange(max_n, dtype=jnp.int32)
    ordinal = img_off[:num_images, None] + slot[None, :]          # global [SEG] ordinal
    slot_valid = slot[None, :] < n_valid[:, None]
    row_idx = seg_pos[jnp.clip(ordinal, 0, total_cap - 1)]        # flat token index
    seg_rows = jnp.take(output_hidden_states.reshape(-1, H),
                        row_idx.reshape(-1), axis=0).astype(jnp.bfloat16)
    seg_rows = jnp.where(slot_valid.reshape(-1, 1), seg_rows, jnp.zeros_like(seg_rows))

    # ----- hoisted text_hidden_fcs: one batched matmul for all images' [SEG] rows -----
    # (the reference applies the MLP to every token then selects [SEG] rows; the MLP is
    #  per-token, so projecting only the gathered rows is semantically identical.)
    emb = text_fc_project(seg_rows,
                          params["w1"].astype(jnp.bfloat16), params["b1"],
                          params["w2"].astype(jnp.bfloat16), params["b2"])
    emb = emb.reshape(num_images, max_n, -1)

    # ----- fused Pallas mask head + losses, HW-tiled, one pallas_call -----
    pred_flat, loss_rows = seg_mask_losses(
        n_valid, gt_counts, emb,
        mask_features.astype(jnp.bfloat16),
        gt_padded.astype(jnp.bfloat16),          # 0/1 exact in bf16; halves the gt DMA
        tile_hw=tile_hw)

    # ----- loss composition (matches the reference aggregation) -----
    # TODO(synk): hungarian_matcher uses scipy.linear_sum_assignment (sequential) —
    # no Pallas equivalent; change_list is treated as empty (gt order unchanged).
    totals = jnp.sum(loss_rows[:, 0, :], axis=0)                  # [128]
    mask_bce_sum, mask_dice_sum, num_masks = totals[0], totals[1], totals[2]

    ce_loss = shifted_ce_loss(logits, labels) * ce_w
    mask_bce_loss = bce_w * mask_bce_sum / (num_masks + 1e-8)
    mask_dice_loss = dice_w * mask_dice_sum / (num_masks + 1e-8)
    mask_loss = mask_bce_loss + mask_dice_loss
    total_loss = ce_loss + mask_loss
    return {
        "loss": total_loss,
        "ce_loss": ce_loss,
        "mask_bce_loss": mask_bce_loss,
        "mask_dice_loss": mask_dice_loss,
        "mask_loss": mask_loss,
        # bf16, padded rows (>= n_valid[i]) zeroed.
        "pred_masks": pred_flat.reshape(num_images, max_n, Hm, Hm),
        "n_valid": n_valid,
    }


# =============================================================================
# Main
# =============================================================================
if __name__ == "__main__":
    key = jax.random.PRNGKey(0)
    B, S, H, C = 2, 8, 32, 16          # batch, seq, hidden_size, out_dim
    Hm = Wm = 16                       # low-res mask resolution
    HW = Hm * Wm
    V = 256                            # vocab (synthetic logits) -> 2 vocab tiles of 128
    seg_token_idx = 7
    n_seg = 2                          # [SEG] tokens per sample
    max_n = 16                         # static query pad (bf16 sublane packing = 16)

    ks = jax.random.split(key, 10)

    params = {
        "w1": jax.random.normal(ks[0], (H, H), jnp.float32) * 0.05,
        "b1": jax.random.normal(ks[1], (1, H), jnp.float32) * 0.01,
        "w2": jax.random.normal(ks[2], (H, C), jnp.float32) * 0.05,
        "b2": jax.random.normal(ks[3], (1, C), jnp.float32) * 0.01,
    }

    # Synthetic VLM hidden states / logits (stand-ins for Qwen2.5-VL output).
    output_hidden_states = jax.random.normal(ks[4], (B, S, H), jnp.float32)
    logits = jax.random.normal(ks[5], (B, S, V), jnp.float32)

    # input_ids with exactly n_seg [SEG] tokens per sample (positions 3 and 6).
    input_ids = jax.random.randint(ks[6], (B, S), 0, V)
    input_ids = jnp.where(input_ids == seg_token_idx, seg_token_idx + 1, input_ids)
    input_ids = input_ids.at[:, 3].set(seg_token_idx).at[:, 6].set(seg_token_idx)
    labels = input_ids

    # Synthetic SAM-style upscaled image features: [num_images, C, Hm*Wm], bf16.
    mask_features = jax.random.normal(ks[7], (B, C, HW), jnp.float32).astype(jnp.bfloat16)

    # Ground-truth binary masks padded to a dense bf16 slab (0/1 exact in bf16).
    gt_masks_list = [
        (jax.random.uniform(ks[8], (n_seg, Hm, Wm)) > 0.5).astype(jnp.float32),
        (jax.random.uniform(ks[9], (n_seg, Hm, Wm)) > 0.5).astype(jnp.float32),
    ]
    num_images = B
    gt_padded = jnp.zeros((num_images, max_n, HW), jnp.bfloat16)
    gt_counts = []
    for i, gm in enumerate(gt_masks_list):
        ni = gm.shape[0]
        gt_padded = gt_padded.at[i, :ni].set(gm.reshape(ni, HW).astype(jnp.bfloat16))
        gt_counts.append(ni)
    gt_counts = jnp.asarray(gt_counts, jnp.int32)
    offset = jnp.arange(B + 1, dtype=jnp.int32)

    out = model_forward(params, output_hidden_states, input_ids, labels, logits,
                        mask_features, offset, gt_padded, gt_counts,
                        seg_token_idx, 1.0, 2.0, 0.5, max_n=max_n, tile_hw=128)
    jax.block_until_ready(out["loss"])

    # ---- numerical checks vs. a pure-JAX reference of the kernel paths ----
    def _bf(a):
        return a.astype(jnp.bfloat16).astype(jnp.float32)

    def ref_image(seg_h, feat, gt_flat):
        h = jnp.maximum(_bf(seg_h) @ _bf(params["w1"]) + params["b1"], 0.0)
        e = _bf(h) @ _bf(params["w2"]) + params["b2"]
        lg = _bf(e) @ _bf(feat)
        bce = jnp.mean(jnp.maximum(lg, 0.0) - lg * gt_flat
                       + jnp.log1p(jnp.exp(-jnp.abs(lg))), axis=-1)
        p = jax.nn.sigmoid(lg)
        dice = 1.0 - (2.0 * jnp.sum(p / 1000.0 * gt_flat, -1) + 1e-6) / (
            jnp.sum(p / 1000.0, -1) + jnp.sum(gt_flat / 1000.0, -1) + 1e-6)
        return lg, bce, dice

    bce_tot, dice_tot, nm = 0.0, 0.0, 0
    for i in range(num_images):
        seg_h = output_hidden_states[i][jnp.array([3, 6])]        # the [SEG] rows
        gt_flat = gt_masks_list[i].reshape(n_seg, HW)
        lg, bce, dice = ref_image(seg_h, _bf(mask_features[i]), gt_flat)
        pm_kernel = out["pred_masks"][i, :n_seg].reshape(n_seg, HW).astype(jnp.float32)
        assert jnp.allclose(pm_kernel, lg, atol=2e-2, rtol=2e-2)
        bce_tot += jnp.sum(bce) / (n_seg + 1e-8) * n_seg
        dice_tot += jnp.sum(dice) / (n_seg + 1e-8) * n_seg
        nm += n_seg
    ref_bce_loss = 2.0 * bce_tot / (nm + 1e-8)
    ref_dice_loss = 0.5 * dice_tot / (nm + 1e-8)
    assert jnp.allclose(out["mask_bce_loss"], ref_bce_loss, atol=5e-3, rtol=5e-3)
    assert jnp.allclose(out["mask_dice_loss"], ref_dice_loss, atol=1e-2, rtol=1e-2)

    # streamed-CE kernel vs. dense reference on the same bf16-cast logits.
    sl = logits[:, :-1, :].astype(jnp.bfloat16).astype(jnp.float32)
    slab = labels[:, 1:]
    logp = jax.nn.log_softmax(sl, axis=-1)
    nll = -jnp.take_along_axis(logp, slab[..., None], axis=-1)[..., 0]
    valid = (slab != -100).astype(jnp.float32)
    ref_ce = jnp.sum(nll * valid) / jnp.maximum(jnp.sum(valid), 1.0)
    assert jnp.allclose(out["ce_loss"], ref_ce * 1.0, atol=1e-3, rtol=1e-3)

    print("KERNEL_OK")
</pallas_src>

<mosaic_0001>
module attributes {stable_mosaic.version = 11 : i64} {
  func.func private @main(%arg0: i32) attributes {dimension_semantics = [#tpu.dimension_semantics<core_parallel>], iteration_bounds = array<i64: 2>, tpu.core_type = #tpu.core_type<sc_scalar_subcore>, window_params = []} {
    return
  }
}

module attributes {stable_mosaic.version = 11 : i64} {
  func.func private @main(%arg0: i32) attributes {dimension_semantics = [#tpu.dimension_semantics<core_parallel>], iteration_bounds = array<i64: 2>, tpu.core_type = #tpu.core_type<sc_scalar_subcore>, window_params = []} {
    return
  }
}

module attributes {stable_mosaic.version = 11 : i64} {
  func.func @_shifted_ce_kernel(%arg0: i32, %arg1: i32, %arg2: memref<16x1xi32, #tpu.memory_space<vmem>>, %arg3: memref<16x128xbf16, #tpu.memory_space<vmem>>, %arg4: memref<1x1x128xf32, #tpu.memory_space<vmem>>, %arg5: memref<16x1xf32, #tpu.memory_space<vmem>>, %arg6: memref<16x1xf32, #tpu.memory_space<vmem>>, %arg7: memref<16x1xf32, #tpu.memory_space<vmem>>) attributes {dimension_semantics = [#tpu.dimension_semantics<parallel>, #tpu.dimension_semantics<arbitrary>], iteration_bounds = array<i64: 1, 2>, scalar_prefetch = 0 : i64, scratch_operands = 3 : i64, tpu.core_type = #tpu.core_type<tc>, window_params = [{transform_indices = @transform_0, window_bounds = array<i64: 16, 1>}, {transform_indices = @transform_1, window_bounds = array<i64: 16, 128>}, {transform_indices = @transform_2, window_bounds = array<i64: 1, 1, 128>}]} {
    %c0_i32 = arith.constant 0 : i32
    %0 = arith.cmpi eq, %arg1, %c0_i32 : i32
    %1 = arith.extui %0 : i1 to i32
    %c0_i32_0 = arith.constant 0 : i32
    %2 = arith.cmpi ne, %1, %c0_i32_0 : i32
    scf.if %2 {
      %cst_20 = arith.constant 0xFF800000 : f32
      %38 = vector.broadcast %cst_20 : f32 to vector<16x1xf32>
      %c0_21 = arith.constant 0 : index
      %c0_22 = arith.constant 0 : index
      %39 = vector.load %arg5[%c0_21, %c0_22] : memref<16x1xf32, #tpu.memory_space<vmem>>, vector<16x1xf32>
      tpu.vector_store %arg5[%c0_21, %c0_22], %38 {strides = array<i32>} : memref<16x1xf32, #tpu.memory_space<vmem>>, vector<16x1xf32>,
      %cst_23 = arith.constant 0.000000e+00 : f32
      %40 = vector.broadcast %cst_23 : f32 to vector<16x1xf32>
      %c0_24 = arith.constant 0 : index
      %c0_25 = arith.constant 0 : index
      %41 = vector.load %arg6[%c0_24, %c0_25] : memref<16x1xf32, #tpu.memory_space<vmem>>, vector<16x1xf32>
      tpu.vector_store %arg6[%c0_24, %c0_25], %40 {strides = array<i32>} : memref<16x1xf32, #tpu.memory_space<vmem>>, vector<16x1xf32>,
      %cst_26 = arith.constant 0.000000e+00 : f32
      %42 = vector.broadcast %cst_26 : f32 to vector<16x1xf32>
      %c0_27 = arith.constant 0 : index
      %c0_28 = arith.constant 0 : index
      %43 = vector.load %arg7[%c0_27, %c0_28] : memref<16x1xf32, #tpu.memory_space<vmem>>, vector<16x1xf32>
      tpu.vector_store %arg7[%c0_27, %c0_28], %42 {strides = array<i32>} : memref<16x1xf32, #tpu.memory_space<vmem>>, vector<16x1xf32>,
    } else {
    }
    %c0 = arith.constant 0 : index
    %c0_1 = arith.constant 0 : index
    %3 = vector.load %arg3[%c0, %c0_1] : memref<16x128xbf16, #tpu.memory_space<vmem>>, vector<16x128xbf16>
    %4 = arith.extf %3 : vector<16x128xbf16> to vector<16x128xf32>
    %c0_2 = arith.constant 0 : index
    %c0_3 = arith.constant 0 : index
    %5 = vector.load %arg2[%c0_2, %c0_3] : memref<16x1xi32, #tpu.memory_space<vmem>>, vector<16x1xi32>
    %c0_4 = arith.constant 0 : index
    %c0_5 = arith.constant 0 : index
    %6 = vector.load %arg5[%c0_4, %c0_5] : memref<16x1xf32, #tpu.memory_space<vmem>>, vector<16x1xf32>
    %cst = arith.constant dense<0xFF800000> : vector<16xf32>
    %7 = vector.multi_reduction <maximumf>, %4, %cst [1] : vector<16x128xf32> to vector<16xf32>
    %8 = vector.shape_cast %7 : vector<16xf32> to vector<16x1xf32>
    %9 = arith.maximumf %6, %8 : vector<16x1xf32>
    %c0_6 = arith.constant 0 : index
    %c0_7 = arith.constant 0 : index
    %10 = vector.load %arg6[%c0_6, %c0_7] : memref<16x1xf32, #tpu.memory_space<vmem>>, vector<16x1xf32>
    %11 = arith.subf %6, %9 : vector<16x1xf32>
    %12 = math.exp %11 : vector<16x1xf32>
    %13 = arith.mulf %10, %12 : vector<16x1xf32>
    %14 = vector.broadcast %9 : vector<16x1xf32> to vector<16x128xf32>
    %15 = arith.subf %4, %14 : vector<16x128xf32>
    %16 = math.exp %15 : vector<16x128xf32>
    %cst_8 = arith.constant dense<0.000000e+00> : vector<16xf32>
    %17 = vector.multi_reduction <add>, %16, %cst_8 [1] : vector<16x128xf32> to vector<16xf32>
    %18 = vector.shape_cast %17 : vector<16xf32> to vector<16x1xf32>
    %19 = arith.addf %13, %18 : vector<16x1xf32>
    %c0_9 = arith.constant 0 : index
    %c0_10 = arith.constant 0 : index
    %20 = vector.load %arg6[%c0_9, %c0_10] : memref<16x1xf32, #tpu.memory_space<vmem>>, vector<16x1xf32>
    tpu.vector_store %arg6[%c0_9, %c0_10], %19 {strides = array<i32>} : memref<16x1xf32, #tpu.memory_space<vmem>>, vector<16x1xf32>,
    %c0_11 = arith.constant 0 : index
    %c0_12 = arith.constant 0 : index
    %21 = vector.load %arg5[%c0_11, %c0_12] : memref<16x1xf32, #tpu.memory_space<vmem>>, vector<16x1xf32>
    tpu.vector_store %arg5[%c0_11, %c0_12], %9 {strides = array<i32>} : memref<16x1xf32, #tpu.memory_space<vmem>>, vector<16x1xf32>,
    %22 = tpu.iota {dimensions = array<i32: 1>} : vector<16x128xi32>
    %c128_i32 = arith.constant 128 : i32
    %23 = arith.muli %arg1, %c128_i32 : i32
    %24 = vector.broadcast %23 : i32 to vector<16x128xi32>
    %25 = arith.addi %22, %24 : vector<16x128xi32>
    %c0_13 = arith.constant 0 : index
    %c0_14 = arith.constant 0 : index
    %26 = vector.load %arg7[%c0_13, %c0_14] : memref<16x1xf32, #tpu.memory_space<vmem>>, vector<16x1xf32>
    %27 = vector.broadcast %5 : vector<16x1xi32> to vector<16x128xi32>
    %28 = arith.cmpi eq, %25, %27 : vector<16x128xi32>
    %cst_15 = arith.constant 0.000000e+00 : f32
    %29 = vector.broadcast %cst_15 : f32 to vector<16x128xf32>
    %30 = arith.select %28, %4, %29 : vector<16x128xi1>, vector<16x128xf32>
    %cst_16 = arith.constant dense<0.000000e+00> : vector<16xf32>
    %31 = vector.multi_reduction <add>, %30, %cst_16 [1] : vector<16x128xf32> to vector<16xf32>
    %32 = vector.shape_cast %31 : vector<16xf32> to vector<16x1xf32>
    %33 = arith.addf %26, %32 : vector<16x1xf32>
    %c0_17 = arith.constant 0 : index
    %c0_18 = arith.constant 0 : index
    %34 = vector.load %arg7[%c0_17, %c0_18] : memref<16x1xf32, #tpu.memory_space<vmem>>, vector<16x1xf32>
    tpu.vector_store %arg7[%c0_17, %c0_18], %33 {strides = array<i32>} : memref<16x1xf32, #tpu.memory_space<vmem>>, vector<16x1xf32>,
    %c1_i32 = arith.constant 1 : i32
    %35 = arith.cmpi eq, %arg1, %c1_i32 : i32
    %36 = arith.extui %35 : i1 to i32
    %c0_i32_19 = arith.constant 0 : i32
    %37 = arith.cmpi ne, %36, %c0_i32_19 : i32
    scf.if %37 {
      %c0_20 = arith.constant 0 : index
      %c0_21 = arith.constant 0 : index
      %38 = vector.load %arg5[%c0_20, %c0_21] : memref<16x1xf32, #tpu.memory_space<vmem>>, vector<16x1xf32>
      %c0_22 = arith.constant 0 : index
      %c0_23 = arith.constant 0 : index
      %39 = vector.load %arg6[%c0_22, %c0_23] : memref<16x1xf32, #tpu.memory_space<vmem>>, vector<16x1xf32>
      %40 = math.log %39 : vector<16x1xf32>
      %41 = arith.addf %38, %40 : vector<16x1xf32>
      %c0_24 = arith.constant 0 : index
      %c0_25 = arith.constant 0 : index
      %42 = vector.load %arg7[%c0_24, %c0_25] : memref<16x1xf32, #tpu.memory_space<vmem>>, vector<16x1xf32>
      %43 = arith.subf %41, %42 : vector<16x1xf32>
      %c-100_i32 = arith.constant -100 : i32
      %44 = vector.broadcast %c-100_i32 : i32 to vector<16x1xi32>
      %45 = arith.cmpi ne, %5, %44 : vector<16x1xi32>
      %46 = arith.extui %45 : vector<16x1xi1> to vector<16x1xi32>
      %47 = arith.sitofp %46 : vector<16x1xi32> to vector<16x1xf32>
      %48 = arith.mulf %43, %47 : vector<16x1xf32>
      %49 = vector.shape_cast %48 : vector<16x1xf32> to vector<1x16x1xf32>
      %cst_26 = arith.constant dense<0.000000e+00> : vector<1xf32>
      %50 = vector.multi_reduction <add>, %49, %cst_26 [1, 2] : vector<1x16x1xf32> to vector<1xf32>
      %51 = vector.shape_cast %50 : vector<1xf32> to vector<1x1x1xf32>
      %52 = vector.extract %51[0, 0, 0] : f32 from vector<1x1x1xf32>
      %53 = vector.shape_cast %47 : vector<16x1xf32> to vector<1x16x1xf32>
      %cst_27 = arith.constant dense<0.000000e+00> : vector<1xf32>
      %54 = vector.multi_reduction <add>, %53, %cst_27 [1, 2] : vector<1x16x1xf32> to vector<1xf32>
      %55 = vector.shape_cast %54 : vector<1xf32> to vector<1x1x1xf32>
      %56 = vector.extract %55[0, 0, 0] : f32 from vector<1x1x1xf32>
      %57 = tpu.iota {dimensions = array<i32: 1>} : vector<1x128xi32>
      %c0_i32_28 = arith.constant 0 : i32
      %58 = vector.broadcast %c0_i32_28 : i32 to vector<1x128xi32>
      %59 = arith.cmpi eq, %57, %58 : vector<1x128xi32>
      %c1_i32_29 = arith.constant 1 : i32
      %60 = vector.broadcast %c1_i32_29 : i32 to vector<1x128xi32>
      %61 = arith.cmpi eq, %57, %60 : vector<1x128xi32>
      %cst_30 = arith.constant 0.000000e+00 : f32
      %62 = vector.broadcast %56 : f32 to vector<1x128xf32>
      %63 = vector.broadcast %cst_30 : f32 to vector<1x128xf32>
      %64 = arith.select %61, %62, %63 : vector<1x128xi1>, vector<1x128xf32>
      %65 = vector.broadcast %52 : f32 to vector<1x128xf32>
      %66 = arith.select %59, %65, %64 : vector<1x128xi1>, vector<1x128xf32>
      %c0_31 = arith.constant 0 : index
      %c0_32 = arith.constant 0 : index
      %c0_33 = arith.constant 0 : index
      %67 = vector.load %arg4[%c0_31, %c0_32, %c0_33] : memref<1x1x128xf32, #tpu.memory_space<vmem>>, vector<1x1x128xf32>
      %68 = vector.shape_cast %67 : vector<1x1x128xf32> to vector<1x128xf32>
      %69 = vector.shape_cast %66 : vector<1x128xf32> to vector<1x1x128xf32>
      tpu.vector_store %arg4[%c0_31, %c0_32, %c0_33], %69 {strides = array<i32>} : memref<1x1x128xf32, #tpu.memory_space<vmem>>, vector<1x1x128xf32>,
    } else {
    }
    return
  }
  func.func @transform_0(%arg0: i32, %arg1: i32) -> (i32, i32) {
    %c0_i32 = arith.constant 0 : i32
    %c0_i32_0 = arith.constant 0 : i32
    return %arg0, %c0_i32 : i32, i32
  }
  func.func @transform_1(%arg0: i32, %arg1: i32) -> (i32, i32) {
    %c0_i32 = arith.constant 0 : i32
    return %arg0, %arg1 : i32, i32
  }
  func.func @transform_2(%arg0: i32, %arg1: i32) -> (i32, i32, i32) {
    %c0_i32 = arith.constant 0 : i32
    %c0_i32_0 = arith.constant 0 : i32
    %c0_i32_1 = arith.constant 0 : i32
    return %arg0, %c0_i32, %c0_i32_0 : i32, i32, i32
  }
}

module attributes {stable_mosaic.version = 11 : i64} {
  func.func @_mask_loss_kernel(%arg0: i32, %arg1: i32, %arg2: memref<2xi32, #tpu.memory_space<smem>>, %arg3: memref<2xi32, #tpu.memory_space<smem>>, %arg4: memref<1x16x16xbf16, #tpu.memory_space<vmem>>, %arg5: memref<1x16x128xbf16, #tpu.memory_space<vmem>>, %arg6: memref<1x16x128xbf16, #tpu.memory_space<vmem>>, %arg7: memref<1x16x128xbf16, #tpu.memory_space<vmem>>, %arg8: memref<1x1x128xf32, #tpu.memory_space<vmem>>, %arg9: memref<16x1xf32, #tpu.memory_space<vmem>>, %arg10: memref<16x1xf32, #tpu.memory_space<vmem>>, %arg11: memref<16x1xf32, #tpu.memory_space<vmem>>, %arg12: memref<16x1xf32, #tpu.memory_space<vmem>>) attributes {dimension_semantics = [#tpu.dimension_semantics<parallel>, #tpu.dimension_semantics<arbitrary>], iteration_bounds = array<i64: 2, 2>, scalar_prefetch = 2 : i64, scratch_operands = 4 : i64, tpu.core_type = #tpu.core_type<tc>, window_params = [{transform_indices = @transform_0, window_bounds = array<i64: 1, 16, 16>}, {transform_indices = @transform_1, window_bounds = array<i64: 1, 16, 128>}, {transform_indices = @transform_2, window_bounds = array<i64: 1, 16, 128>}, {transform_indices = @transform_3, window_bounds = array<i64: 1, 16, 128>}, {transform_indices = @transform_4, window_bounds = array<i64: 1, 1, 128>}]} {
    %0 = arith.index_cast %arg0 : i32 to index
    %1 = memref.load %arg2[%0] : memref<2xi32, #tpu.memory_space<smem>>
    %2 = arith.index_cast %arg0 : i32 to index
    %3 = memref.load %arg3[%2] : memref<2xi32, #tpu.memory_space<smem>>
    %c0_i32 = arith.constant 0 : i32
    %4 = arith.cmpi eq, %arg1, %c0_i32 : i32
    %5 = arith.extui %4 : i1 to i32
    %c0_i32_0 = arith.constant 0 : i32
    %6 = arith.cmpi ne, %5, %c0_i32_0 : i32
    scf.if %6 {
      %cst_39 = arith.constant 0.000000e+00 : f32
      %70 = vector.broadcast %cst_39 : f32 to vector<16x1xf32>
      %c0_40 = arith.constant 0 : index
      %c0_41 = arith.constant 0 : index
      %71 = vector.load %arg9[%c0_40, %c0_41] : memref<16x1xf32, #tpu.memory_space<vmem>>, vector<16x1xf32>
      tpu.vector_store %arg9[%c0_40, %c0_41], %70 {strides = array<i32>} : memref<16x1xf32, #tpu.memory_space<vmem>>, vector<16x1xf32>,
      %cst_42 = arith.constant 0.000000e+00 : f32
      %72 = vector.broadcast %cst_42 : f32 to vector<16x1xf32>
      %c0_43 = arith.constant 0 : index
      %c0_44 = arith.constant 0 : index
      %73 = vector.load %arg10[%c0_43, %c0_44] : memref<16x1xf32, #tpu.memory_space<vmem>>, vector<16x1xf32>
      tpu.vector_store %arg10[%c0_43, %c0_44], %72 {strides = array<i32>} : memref<16x1xf32, #tpu.memory_space<vmem>>, vector<16x1xf32>,
      %cst_45 = arith.constant 0.000000e+00 : f32
      %74 = vector.broadcast %cst_45 : f32 to vector<16x1xf32>
      %c0_46 = arith.constant 0 : index
      %c0_47 = arith.constant 0 : index
      %75 = vector.load %arg11[%c0_46, %c0_47] : memref<16x1xf32, #tpu.memory_space<vmem>>, vector<16x1xf32>
      tpu.vector_store %arg11[%c0_46, %c0_47], %74 {strides = array<i32>} : memref<16x1xf32, #tpu.memory_space<vmem>>, vector<16x1xf32>,
      %cst_48 = arith.constant 0.000000e+00 : f32
      %76 = vector.broadcast %cst_48 : f32 to vector<16x1xf32>
      %c0_49 = arith.constant 0 : index
      %c0_50 = arith.constant 0 : index
      %77 = vector.load %arg12[%c0_49, %c0_50] : memref<16x1xf32, #tpu.memory_space<vmem>>, vector<16x1xf32>
      tpu.vector_store %arg12[%c0_49, %c0_50], %76 {strides = array<i32>} : memref<16x1xf32, #tpu.memory_space<vmem>>, vector<16x1xf32>,
    } else {
    }
    %c0 = arith.constant 0 : index
    %c0_1 = arith.constant 0 : index
    %c0_2 = arith.constant 0 : index
    %7 = vector.load %arg4[%c0, %c0_1, %c0_2] : memref<1x16x16xbf16, #tpu.memory_space<vmem>>, vector<1x16x16xbf16>
    %8 = vector.shape_cast %7 : vector<1x16x16xbf16> to vector<16x16xbf16>
    %c0_3 = arith.constant 0 : index
    %c0_4 = arith.constant 0 : index
    %c0_5 = arith.constant 0 : index
    %9 = vector.load %arg5[%c0_3, %c0_4, %c0_5] : memref<1x16x128xbf16, #tpu.memory_space<vmem>>, vector<1x16x128xbf16>
    %10 = vector.shape_cast %9 : vector<1x16x128xbf16> to vector<16x128xbf16>
    %cst = arith.constant dense<0.000000e+00> : vector<16x128xf32>
    %11 = tpu.matmul %8, %10, %cst {dimension_numbers = #tpu.dot_dimension_numbers<[1], [0], [0], [1], [0, 0, 1, 1], [], []>} : vector<16x16xbf16>, vector<16x128xbf16>, vector<16x128xf32> -> vector<16x128xf32>
    %12 = tpu.iota {dimensions = array<i32: 0>} : vector<16x1xi32>
    %13 = vector.broadcast %1 : i32 to vector<16x1xi32>
    %14 = arith.cmpi slt, %12, %13 : vector<16x1xi32>
    %15 = arith.extui %14 : vector<16x1xi1> to vector<16x1xi32>
    %16 = arith.sitofp %15 : vector<16x1xi32> to vector<16x1xf32>
    %cst_6 = arith.constant 0.000000e+00 : f32
    %17 = vector.shape_cast %14 : vector<16x1xi1> to vector<16x1xi1>
    %18 = vector.broadcast %17 : vector<16x1xi1> to vector<16x128xi1>
    %19 = vector.broadcast %cst_6 : f32 to vector<16x128xf32>
    %20 = arith.select %18, %11, %19 : vector<16x128xi1>, vector<16x128xf32>
    %21 = arith.truncf %20 : vector<16x128xf32> to vector<16x128xbf16>
    %c0_7 = arith.constant 0 : index
    %c0_8 = arith.constant 0 : index
    %c0_9 = arith.constant 0 : index
    %22 = vector.load %arg7[%c0_7, %c0_8, %c0_9] : memref<1x16x128xbf16, #tpu.memory_space<vmem>>, vector<1x16x128xbf16>
    %23 = vector.shape_cast %22 : vector<1x16x128xbf16> to vector<16x128xbf16>
    %24 = vector.shape_cast %21 : vector<16x128xbf16> to vector<1x16x128xbf16>
    tpu.vector_store %arg7[%c0_7, %c0_8, %c0_9], %24 {strides = array<i32>} : memref<1x16x128xbf16, #tpu.memory_space<vmem>>, vector<1x16x128xbf16>,
    %c0_10 = arith.constant 0 : index
    %c0_11 = arith.constant 0 : index
    %c0_12 = arith.constant 0 : index
    %25 = vector.load %arg6[%c0_10, %c0_11, %c0_12] : memref<1x16x128xbf16, #tpu.memory_space<vmem>>, vector<1x16x128xbf16>
    %26 = vector.shape_cast %25 : vector<1x16x128xbf16> to vector<16x128xbf16>
    %27 = arith.extf %26 : vector<16x128xbf16> to vector<16x128xf32>
    %28 = math.absf %11 : vector<16x128xf32>
    %cst_13 = arith.constant 0.000000e+00 : f32
    %29 = vector.broadcast %cst_13 : f32 to vector<16x128xf32>
    %30 = arith.subf %29, %28 : vector<16x128xf32>
    %31 = math.exp %30 : vector<16x128xf32>
    %cst_14 = arith.constant 0.000000e+00 : f32
    %32 = vector.broadcast %cst_14 : f32 to vector<16x128xf32>
    %33 = arith.maximumf %11, %32 : vector<16x128xf32>
    %34 = arith.mulf %11, %27 : vector<16x128xf32>
    %35 = arith.subf %33, %34 : vector<16x128xf32>
    %36 = math.log1p %31 : vector<16x128xf32>
    %37 = arith.addf %35, %36 : vector<16x128xf32>
    %cst_15 = arith.constant 1.000000e+00 : f32
    %38 = vector.broadcast %cst_15 : f32 to vector<16x128xf32>
    %39 = arith.addf %38, %31 : vector<16x128xf32>
    %cst_16 = arith.constant 1.000000e+00 : f32
    %40 = vector.broadcast %cst_16 : f32 to vector<16x128xf32>
    %41 = arith.divf %40, %39 : vector<16x128xf32>
    %cst_17 = arith.constant 0.000000e+00 : f32
    %42 = vector.broadcast %cst_17 : f32 to vector<16x128xf32>
    %43 = arith.cmpf oge, %11, %42 : vector<16x128xf32>
    %44 = arith.mulf %31, %41 : vector<16x128xf32>
    %45 = arith.select %43, %41, %44 : vector<16x128xi1>, vector<16x128xf32>
    %c0_18 = arith.constant 0 : index
    %c0_19 = arith.constant 0 : index
    %46 = vector.load %arg9[%c0_18, %c0_19] : memref<16x1xf32, #tpu.memory_space<vmem>>, vector<16x1xf32>
    %cst_20 = arith.constant dense<0.000000e+00> : vector<16xf32>
    %47 = vector.multi_reduction <add>, %37, %cst_20 [1] : vector<16x128xf32> to vector<16xf32>
    %48 = vector.shape_cast %47 : vector<16xf32> to vector<16x1xf32>
    %49 = arith.addf %46, %48 : vector<16x1xf32>
    %c0_21 = arith.constant 0 : index
    %c0_22 = arith.constant 0 : index
    %50 = vector.load %arg9[%c0_21, %c0_22] : memref<16x1xf32, #tpu.memory_space<vmem>>, vector<16x1xf32>
    tpu.vector_store %arg9[%c0_21, %c0_22], %49 {strides = array<i32>} : memref<16x1xf32, #tpu.memory_space<vmem>>, vector<16x1xf32>,
    %c0_23 = arith.constant 0 : index
    %c0_24 = arith.constant 0 : index
    %51 = vector.load %arg10[%c0_23, %c0_24] : memref<16x1xf32, #tpu.memory_space<vmem>>, vector<16x1xf32>
    %52 = arith.mulf %45, %27 : vector<16x128xf32>
    %cst_25 = arith.constant dense<0.000000e+00> : vector<16xf32>
    %53 = vector.multi_reduction <add>, %52, %cst_25 [1] : vector<16x128xf32> to vector<16xf32>
    %54 = vector.shape_cast %53 : vector<16xf32> to vector<16x1xf32>
    %55 = arith.addf %51, %54 : vector<16x1xf32>
    %c0_26 = arith.constant 0 : index
    %c0_27 = arith.constant 0 : index
    %56 = vector.load %arg10[%c0_26, %c0_27] : memref<16x1xf32, #tpu.memory_space<vmem>>, vector<16x1xf32>
    tpu.vector_store %arg10[%c0_26, %c0_27], %55 {strides = array<i32>} : memref<16x1xf32, #tpu.memory_space<vmem>>, vector<16x1xf32>,
    %c0_28 = arith.constant 0 : index
    %c0_29 = arith.constant 0 : index
    %57 = vector.load %arg11[%c0_28, %c0_29] : memref<16x1xf32, #tpu.memory_space<vmem>>, vector<16x1xf32>
    %cst_30 = arith.constant dense<0.000000e+00> : vector<16xf32>
    %58 = vector.multi_reduction <add>, %45, %cst_30 [1] : vector<16x128xf32> to vector<16xf32>
    %59 = vector.shape_cast %58 : vector<16xf32> to vector<16x1xf32>
    %60 = arith.addf %57, %59 : vector<16x1xf32>
    %c0_31 = arith.constant 0 : index
    %c0_32 = arith.constant 0 : index
    %61 = vector.load %arg11[%c0_31, %c0_32] : memref<16x1xf32, #tpu.memory_space<vmem>>, vector<16x1xf32>
    tpu.vector_store %arg11[%c0_31, %c0_32], %60 {strides = array<i32>} : memref<16x1xf32, #tpu.memory_space<vmem>>, vector<16x1xf32>,
    %c0_33 = arith.constant 0 : index
    %c0_34 = arith.constant 0 : index
    %62 = vector.load %arg12[%c0_33, %c0_34] : memref<16x1xf32, #tpu.memory_space<vmem>>, vector<16x1xf32>
    %cst_35 = arith.constant dense<0.000000e+00> : vector<16xf32>
    %63 = vector.multi_reduction <add>, %27, %cst_35 [1] : vector<16x128xf32> to vector<16xf32>
    %64 = vector.shape_cast %63 : vector<16xf32> to vector<16x1xf32>
    %65 = arith.addf %62, %64 : vector<16x1xf32>
    %c0_36 = arith.constant 0 : index
    %c0_37 = arith.constant 0 : index
    %66 = vector.load %arg12[%c0_36, %c0_37] : memref<16x1xf32, #tpu.memory_space<vmem>>, vector<16x1xf32>
    tpu.vector_store %arg12[%c0_36, %c0_37], %65 {strides = array<i32>} : memref<16x1xf32, #tpu.memory_space<vmem>>, vector<16x1xf32>,
    %c1_i32 = arith.constant 1 : i32
    %67 = arith.cmpi eq, %arg1, %c1_i32 : i32
    %68 = arith.extui %67 : i1 to i32
    %c0_i32_38 = arith.constant 0 : i32
    %69 = arith.cmpi ne, %68, %c0_i32_38 : i32
    scf.if %69 {
      %c0_39 = arith.constant 0 : index
      %c0_40 = arith.constant 0 : index
      %70 = vector.load %arg9[%c0_39, %c0_40] : memref<16x1xf32, #tpu.memory_space<vmem>>, vector<16x1xf32>
      %cst_41 = arith.constant 3.906250e-03 : f32
      %71 = vector.broadcast %cst_41 : f32 to vector<16x1xf32>
      %72 = arith.mulf %70, %71 : vector<16x1xf32>
      %c0_42 = arith.constant 0 : index
      %c0_43 = arith.constant 0 : index
      %73 = vector.load %arg10[%c0_42, %c0_43] : memref<16x1xf32, #tpu.memory_space<vmem>>, vector<16x1xf32>
      %cst_44 = arith.constant 1.000000e+03 : f32
      %74 = vector.broadcast %cst_44 : f32 to vector<16x1xf32>
      %75 = arith.divf %73, %74 : vector<16x1xf32>
      %cst_45 = arith.constant 2.000000e+00 : f32
      %76 = vector.broadcast %cst_45 : f32 to vector<16x1xf32>
      %77 = arith.mulf %76, %75 : vector<16x1xf32>
      %cst_46 = arith.constant 9.99999997E-7 : f32
      %78 = vector.broadcast %cst_46 : f32 to vector<16x1xf32>
      %79 = arith.addf %77, %78 : vector<16x1xf32>
      %c0_47 = arith.constant 0 : index
      %c0_48 = arith.constant 0 : index
      %80 = vector.load %arg11[%c0_47, %c0_48] : memref<16x1xf32, #tpu.memory_space<vmem>>, vector<16x1xf32>
      %cst_49 = arith.constant 1.000000e+03 : f32
      %81 = vector.broadcast %cst_49 : f32 to vector<16x1xf32>
      %82 = arith.divf %80, %81 : vector<16x1xf32>
      %c0_50 = arith.constant 0 : index
      %c0_51 = arith.constant 0 : index
      %83 = vector.load %arg12[%c0_50, %c0_51] : memref<16x1xf32, #tpu.memory_space<vmem>>, vector<16x1xf32>
      %cst_52 = arith.constant 1.000000e+03 : f32
      %84 = vector.broadcast %cst_52 : f32 to vector<16x1xf32>
      %85 = arith.divf %83, %84 : vector<16x1xf32>
      %86 = arith.addf %82, %85 : vector<16x1xf32>
      %cst_53 = arith.constant 9.99999997E-7 : f32
      %87 = vector.broadcast %cst_53 : f32 to vector<16x1xf32>
      %88 = arith.addf %86, %87 : vector<16x1xf32>
      %89 = arith.divf %79, %88 : vector<16x1xf32>
      %cst_54 = arith.constant 1.000000e+00 : f32
      %90 = vector.broadcast %cst_54 : f32 to vector<16x1xf32>
      %91 = arith.subf %90, %89 : vector<16x1xf32>
      %92 = arith.mulf %72, %16 : vector<16x1xf32>
      %93 = vector.shape_cast %92 : vector<16x1xf32> to vector<1x16x1xf32>
      %cst_55 = arith.constant dense<0.000000e+00> : vector<1xf32>
      %94 = vector.multi_reduction <add>, %93, %cst_55 [1, 2] : vector<1x16x1xf32> to vector<1xf32>
      %95 = vector.shape_cast %94 : vector<1xf32> to vector<1x1x1xf32>
      %96 = vector.extract %95[0, 0, 0] : f32 from vector<1x1x1xf32>
      %97 = arith.mulf %91, %16 : vector<16x1xf32>
      %98 = vector.shape_cast %97 : vector<16x1xf32> to vector<1x16x1xf32>
      %cst_56 = arith.constant dense<0.000000e+00> : vector<1xf32>
      %99 = vector.multi_reduction <add>, %98, %cst_56 [1, 2] : vector<1x16x1xf32> to vector<1xf32>
      %100 = vector.shape_cast %99 : vector<1xf32> to vector<1x1x1xf32>
      %101 = vector.extract %100[0, 0, 0] : f32 from vector<1x1x1xf32>
      %102 = arith.sitofp %1 : i32 to f32
      %cst_57 = arith.constant 9.99999993E-9 : f32
      %103 = arith.addf %102, %cst_57 : f32
      %104 = arith.divf %102, %103 : f32
      %105 = arith.cmpi eq, %3, %1 : i32
      %106 = arith.extui %105 : i1 to i32
      %107 = arith.sitofp %106 : i32 to f32
      %108 = arith.mulf %96, %104 : f32
      %109 = arith.mulf %108, %107 : f32
      %110 = arith.mulf %101, %104 : f32
      %111 = arith.mulf %110, %107 : f32
      %cst_58 = arith.constant 1.000000e+00 : f32
      %112 = arith.select %105, %102, %cst_58 : f32
      %113 = tpu.iota {dimensions = array<i32: 1>} : vector<1x128xi32>
      %c0_i32_59 = arith.constant 0 : i32
      %114 = vector.broadcast %c0_i32_59 : i32 to vector<1x128xi32>
      %115 = arith.cmpi eq, %113, %114 : vector<1x128xi32>
      %c1_i32_60 = arith.constant 1 : i32
      %116 = vector.broadcast %c1_i32_60 : i32 to vector<1x128xi32>
      %117 = arith.cmpi eq, %113, %116 : vector<1x128xi32>
      %c2_i32 = arith.constant 2 : i32
      %118 = vector.broadcast %c2_i32 : i32 to vector<1x128xi32>
      %119 = arith.cmpi eq, %113, %118 : vector<1x128xi32>
      %cst_61 = arith.constant 0.000000e+00 : f32
      %120 = vector.broadcast %112 : f32 to vector<1x128xf32>
      %121 = vector.broadcast %cst_61 : f32 to vector<1x128xf32>
      %122 = arith.select %119, %120, %121 : vector<1x128xi1>, vector<1x128xf32>
      %123 = vector.broadcast %111 : f32 to vector<1x128xf32>
      %124 = arith.select %117, %123, %122 : vector<1x128xi1>, vector<1x128xf32>
      %125 = vector.broadcast %109 : f32 to vector<1x128xf32>
      %126 = arith.select %115, %125, %124 : vector<1x128xi1>, vector<1x128xf32>
      %c0_62 = arith.constant 0 : index
      %c0_63 = arith.constant 0 : index
      %c0_64 = arith.constant 0 : index
      %127 = vector.load %arg8[%c0_62, %c0_63, %c0_64] : memref<1x1x128xf32, #tpu.memory_space<vmem>>, vector<1x1x128xf32>
      %128 = vector.shape_cast %127 : vector<1x1x128xf32> to vector<1x128xf32>
      %129 = vector.shape_cast %126 : vector<1x128xf32> to vector<1x1x128xf32>
      tpu.vector_store %arg8[%c0_62, %c0_63, %c0_64], %129 {strides = array<i32>} : memref<1x1x128xf32, #tpu.memory_space<vmem>>, vector<1x1x128xf32>,
    } else {
    }
    return
  }
  func.func @transform_0(%arg0: i32, %arg1: i32, %arg2: memref<2xi32, #tpu.memory_space<smem>>, %arg3: memref<2xi32, #tpu.memory_space<smem>>) -> (i32, i32, i32) {
    %c0_i32 = arith.constant 0 : i32
    %c0_i32_0 = arith.constant 0 : i32
    %c0_i32_1 = arith.constant 0 : i32
    return %arg0, %c0_i32, %c0_i32_0 : i32, i32, i32
  }
  func.func @transform_1(%arg0: i32, %arg1: i32, %arg2: memref<2xi32, #tpu.memory_space<smem>>, %arg3: memref<2xi32, #tpu.memory_space<smem>>) -> (i32, i32, i32) {
    %c0_i32 = arith.constant 0 : i32
    %c0_i32_0 = arith.constant 0 : i32
    return %arg0, %c0_i32, %arg1 : i32, i32, i32
  }
  func.func @transform_2(%arg0: i32, %arg1: i32, %arg2: memref<2xi32, #tpu.memory_space<smem>>, %arg3: memref<2xi32, #tpu.memory_space<smem>>) -> (i32, i32, i32) {
    %c0_i32 = arith.constant 0 : i32
    %c0_i32_0 = arith.constant 0 : i32
    return %arg0, %c0_i32, %arg1 : i32, i32, i32
  }
  func.func @transform_3(%arg0: i32, %arg1: i32, %arg2: memref<2xi32, #tpu.memory_space<smem>>, %arg3: memref<2xi32, #tpu.memory_space<smem>>) -> (i32, i32, i32) {
    %c0_i32 = arith.constant 0 : i32
    %c0_i32_0 = arith.constant 0 : i32
    return %arg0, %c0_i32, %arg1 : i32, i32, i32
  }
  func.func @transform_4(%arg0: i32, %arg1: i32, %arg2: memref<2xi32, #tpu.memory_space<smem>>, %arg3: memref<2xi32, #tpu.memory_space<smem>>) -> (i32, i32, i32) {
    %c0_i32 = arith.constant 0 : i32
    %c0_i32_0 = arith.constant 0 : i32
    %c0_i32_1 = arith.constant 0 : i32
    return %arg0, %c0_i32, %c0_i32_0 : i32, i32, i32
  }
}

module attributes {stable_mosaic.version = 11 : i64} {
  func.func @_text_fc_kernel(%arg0: i32, %arg1: memref<32x32xbf16, #tpu.memory_space<vmem>>, %arg2: memref<32x32xbf16, #tpu.memory_space<vmem>>, %arg3: memref<1x32xf32, #tpu.memory_space<vmem>>, %arg4: memref<32x16xbf16, #tpu.memory_space<vmem>>, %arg5: memref<1x16xf32, #tpu.memory_space<vmem>>, %arg6: memref<32x16xbf16, #tpu.memory_space<vmem>>) attributes {dimension_semantics = [#tpu.dimension_semantics<parallel>], iteration_bounds = array<i64: 1>, scalar_prefetch = 0 : i64, scratch_operands = 0 : i64, tpu.core_type = #tpu.core_type<tc>, window_params = [{transform_indices = @transform_0, window_bounds = array<i64: 32, 32>}, {pipeline_mode = #tpu.pipeline_mode<synchronous>, transform_indices = @transform_1, window_bounds = array<i64: 32, 32>}, {pipeline_mode = #tpu.pipeline_mode<synchronous>, transform_indices = @transform_2, window_bounds = array<i64: 1, 32>}, {pipeline_mode = #tpu.pipeline_mode<synchronous>, transform_indices = @transform_3, window_bounds = array<i64: 32, 16>}, {pipeline_mode = #tpu.pipeline_mode<synchronous>, transform_indices = @transform_4, window_bounds = array<i64: 1, 16>}, {transform_indices = @transform_5, window_bounds = array<i64: 32, 16>}]} {
    %c0 = arith.constant 0 : index
    %c0_0 = arith.constant 0 : index
    %0 = vector.load %arg1[%c0, %c0_0] : memref<32x32xbf16, #tpu.memory_space<vmem>>, vector<32x32xbf16>
    %c0_1 = arith.constant 0 : index
    %c0_2 = arith.constant 0 : index
    %1 = vector.load %arg2[%c0_1, %c0_2] : memref<32x32xbf16, #tpu.memory_space<vmem>>, vector<32x32xbf16>
    %cst = arith.constant dense<0.000000e+00> : vector<32x32xf32>
    %2 = tpu.matmul %0, %1, %cst {dimension_numbers = #tpu.dot_dimension_numbers<[1], [0], [0], [1], [0, 0, 1, 1], [], []>} : vector<32x32xbf16>, vector<32x32xbf16>, vector<32x32xf32> -> vector<32x32xf32>
    %c0_3 = arith.constant 0 : index
    %c0_4 = arith.constant 0 : index
    %3 = vector.load %arg3[%c0_3, %c0_4] : memref<1x32xf32, #tpu.memory_space<vmem>>, vector<1x32xf32>
    %4 = vector.broadcast %3 : vector<1x32xf32> to vector<32x32xf32>
    %5 = arith.addf %2, %4 : vector<32x32xf32>
    %cst_5 = arith.constant 0.000000e+00 : f32
    %6 = vector.broadcast %cst_5 : f32 to vector<32x32xf32>
    %7 = arith.maximumf %5, %6 : vector<32x32xf32>
    %8 = arith.truncf %7 : vector<32x32xf32> to vector<32x32xbf16>
    %c0_6 = arith.constant 0 : index
    %c0_7 = arith.constant 0 : index
    %9 = vector.load %arg4[%c0_6, %c0_7] : memref<32x16xbf16, #tpu.memory_space<vmem>>, vector<32x16xbf16>
    %cst_8 = arith.constant dense<0.000000e+00> : vector<32x16xf32>
    %10 = tpu.matmul %8, %9, %cst_8 {dimension_numbers = #tpu.dot_dimension_numbers<[1], [0], [0], [1], [0, 0, 1, 1], [], []>} : vector<32x32xbf16>, vector<32x16xbf16>, vector<32x16xf32> -> vector<32x16xf32>
    %c0_9 = arith.constant 0 : index
    %c0_10 = arith.constant 0 : index
    %11 = vector.load %arg5[%c0_9, %c0_10] : memref<1x16xf32, #tpu.memory_space<vmem>>, vector<1x16xf32>
    %12 = vector.broadcast %11 : vector<1x16xf32> to vector<32x16xf32>
    %13 = arith.addf %10, %12 : vector<32x16xf32>
    %14 = arith.truncf %13 : vector<32x16xf32> to vector<32x16xbf16>
    %c0_11 = arith.constant 0 : index
    %c0_12 = arith.constant 0 : index
    %15 = vector.load %arg6[%c0_11, %c0_12] : memref<32x16xbf16, #tpu.memory_space<vmem>>, vector<32x16xbf16>
    tpu.vector_store %arg6[%c0_11, %c0_12], %14 {strides = array<i32>} : memref<32x16xbf16, #tpu.memory_space<vmem>>, vector<32x16xbf16>,
    return
  }
  func.func @transform_0(%arg0: i32) -> (i32, i32) {
    %c0_i32 = arith.constant 0 : i32
    %c0_i32_0 = arith.constant 0 : i32
    return %arg0, %c0_i32 : i32, i32
  }
  func.func @transform_1(%arg0: i32) -> (i32, i32) {
    %c0_i32 = arith.constant 0 : i32
    %c0_i32_0 = arith.constant 0 : i32
    %c0_i32_1 = arith.constant 0 : i32
    return %c0_i32, %c0_i32_0 : i32, i32
  }
  func.func @transform_2(%arg0: i32) -> (i32, i32) {
    %c0_i32 = arith.constant 0 : i32
    %c0_i32_0 = arith.constant 0 : i32
    %c0_i32_1 = arith.constant 0 : i32
    return %c0_i32, %c0_i32_0 : i32, i32
  }
  func.func @transform_3(%arg0: i32) -> (i32, i32) {
    %c0_i32 = arith.constant 0 : i32
    %c0_i32_0 = arith.constant 0 : i32
    %c0_i32_1 = arith.constant 0 : i32
    return %c0_i32, %c0_i32_0 : i32, i32
  }
  func.func @transform_4(%arg0: i32) -> (i32, i32) {
    %c0_i32 = arith.constant 0 : i32
    %c0_i32_0 = arith.constant 0 : i32
    %c0_i32_1 = arith.constant 0 : i32
    return %c0_i32, %c0_i32_0 : i32, i32
  }
  func.func @transform_5(%arg0: i32) -> (i32, i32) {
    %c0_i32 = arith.constant 0 : i32
    %c0_i32_0 = arith.constant 0 : i32
    return %arg0, %c0_i32 : i32, i32
  }
}

</mosaic_0001>

<llo_original>
// kernel: model_forward.5
$region0: #{model_forward.5}
  #allocation0 [shape = 'u32[]', space=smem, size = 0x4, offset = 0x4, fixed_abs, tag = 'smem constant byte address 0x4 - core index']
  #allocation1 [shape = 'u32[144,128]{1,0:T(1,128)}', space=vmem, size = 0x12000, scoped, tag = 'internal scratch']
  #allocation2 [shape = 'f32[16,1]{1,0:T(8,128)}', space=vmem, size = 0x2000, scoped, tag = 'scratch operand']
  #allocation3 [shape = 'f32[16,1]{1,0:T(8,128)}', space=vmem, size = 0x2000, scoped, tag = 'scratch operand']
  #allocation4 [shape = 'f32[16,1]{1,0:T(8,128)}', space=vmem, size = 0x2000, scoped, tag = 'scratch operand']
  %s0 = inlined_call_operand.vmem [shape: s32[16,1], index: 0, kind: input, shape index: {}]
  %s1 = inlined_call_operand.vmem [shape: bf16[16,256], index: 1, kind: input, shape index: {}]
  %s2 = inlined_call_operand.vmem [shape: f32[1,1,128], index: 2, kind: output, shape index: {}]
  %s3 = sld [smem:[#allocation0]]
  $region90: #{model_forward.5} parent=0
    _
  %s5 = ssub.s32 1, %s3
  %s6 = scalar_select 0, %s5, %s3
  $region1: #{model_forward.5} parent=0
    #allocation5 [shape = 'u8[8192]{0}', space=vmem, size = 0x2000, scoped, tag = 'input window, operand 1']
    loop: start=0, step=1, limit=4
    $region2: #{model_forward.5} parent=1 // loop_pre_header
      _
    $region3: #{model_forward.5} parent=1 // loop_header
      %s8 = sphi 0, %s12
      %p9 = scmp.ge.s32.totalorder %s8, 4
      %s15 = sphi 0, %s27
      %s16 = sphi 0, %s23
      %s17 = sphi 0, %s15
      %s18 = sphi 0, %s16
      %s19 = sphi 0, %s17
      %s20 = sphi 0, %s18
      %s30 = sphi 0, %s32
      %s33 = sphi 0, %s30
      %s34 = sphi 0, %s33
      %s50 = sphi 0, %s34
      %s58 = sphi 0, %s60
      %s61 = sphi 0, %s58
      %s62 = sphi 0, %s61
      %s78 = sphi 0, %s62
      %s84 = sphi 0, %s86
      %s87 = sphi 0, %s84
      %s88 = sphi 0, %s87
      %s104 = sphi 0, %s88
    $region4: #{model_forward.5} parent=1 // loop_header_branch
      %11 = sbr.rel (%p9) target = $region8
    $region5: #{model_forward.5} parent=1 // loop_body
      %s13 = ssub.s32 %s8, 1
      %s14 = ssub.s32 %s8, 2
      %s21 = sadd.s32 1, %s16
      %p22 = scmp.ge.s32.totalorder %s21, 2
      %s23 = scalar_select %p22, 0, %s21
      %s24 = sadd.s32 1, %s15
      %s25 = scalar_select %p22, %s24, %s15
      %p26 = scmp.ge.s32.totalorder %s25, 1
      %s27 = scalar_select %p26, 0, %s25
      %s28 = ssub.s32 %s15, %s27
      %p29 = scmp.eq.s32.totalorder %s28, 0
      %s31 = sadd.s32 %s30, 1
      %s32 = scalar_select %p29, %s30, %s31
      %p35 = pneg %p29
      %p36 = scmp.eq.s32.totalorder %s8, 1
      %p37 = por %p35, %p36
      %p38 = scmp.ne.s32.totalorder %s30, %s33
      %p39 = scmp.eq.s32.totalorder %s8, 0
      %p40 = por %p38, %p39
      %p41 = scmp.ne.s32.totalorder %s30, %s33
      %p42 = scmp.eq.s32.totalorder %s13, 1
      %p43 = por %p41, %p42
      %p44 = scmp.ne.s32.totalorder %s33, %s34
      %p45 = scmp.eq.s32.totalorder %s13, 0
      %p46 = por %p44, %p45
      %p47 = scmp.ne.s32.totalorder %s33, %s34
      %p48 = scmp.eq.s32.totalorder %s14, 1
      %p49 = por %p47, %p48
      %p51 = scmp.ne.s32.totalorder %s34, %s50
      %p52 = scmp.eq.s32.totalorder %s14, 0
      %p53 = por %p51, %p52
      %s54 = ssub.s32 %s15, %s27
      %s55 = ssub.s32 %s16, %s23
      %s56 = sor.u32 %s54, %s55
      %p57 = scmp.eq.s32.totalorder %s56, 0
      %s59 = sadd.s32 %s58, 1
      %s60 = scalar_select %p57, %s58, %s59
      %p63 = pneg %p57
      %p64 = scmp.eq.s32.totalorder %s8, 1
      %p65 = por %p63, %p64
      %p66 = scmp.ne.s32.totalorder %s58, %s61
      %p67 = scmp.eq.s32.totalorder %s8, 0
      %p68 = por %p66, %p67
      %p69 = scmp.ne.s32.totalorder %s58, %s61
      %p70 = scmp.eq.s32.totalorder %s13, 1
      %p71 = por %p69, %p70
      %p72 = scmp.ne.s32.totalorder %s61, %s62
      %p73 = scmp.eq.s32.totalorder %s13, 0
      %p74 = por %p72, %p73
      %p75 = scmp.ne.s32.totalorder %s61, %s62
      %p76 = scmp.eq.s32.totalorder %s14, 1
      %p77 = por %p75, %p76
      %p79 = scmp.ne.s32.totalorder %s62, %s78
      %p80 = scmp.eq.s32.totalorder %s14, 0
      %p81 = por %p79, %p80
      %s82 = ssub.s32 %s15, %s27
      %p83 = scmp.eq.s32.totalorder %s82, 0
      %s85 = sadd.s32 %s84, 1
      %s86 = scalar_select %p83, %s84, %s85
      %p89 = pneg %p83
      %p90 = scmp.eq.s32.totalorder %s8, 1
      %p91 = por %p89, %p90
      %p92 = scmp.ne.s32.totalorder %s84, %s87
      %p93 = scmp.eq.s32.totalorder %s8, 0
      %p94 = por %p92, %p93
      %p95 = scmp.ne.s32.totalorder %s84, %s87
      %p96 = scmp.eq.s32.totalorder %s13, 1
      %p97 = por %p95, %p96
      %p98 = scmp.ne.s32.totalorder %s87, %s88
      %p99 = scmp.eq.s32.totalorder %s13, 0
      %p100 = por %p98, %p99
      %p101 = scmp.ne.s32.totalorder %s87, %s88
      %p102 = scmp.eq.s32.totalorder %s14, 1
      %p103 = por %p101, %p102
      %p105 = scmp.ne.s32.totalorder %s88, %s104
      %p106 = scmp.eq.s32.totalorder %s14, 0
      %p107 = por %p105, %p106
      %p108 = scmp.le.s32.totalorder 1, %s8
      %p109 = scmp.lt.s32.totalorder %s8, 3
      %p110 = pnand %p108, %p109
      %p111 = pneg %p110
      // Predicated region
      $region9: #{model_forward.5} parent=5 // pred_check
        _
      $region10: #{model_forward.5} parent=5 // pred_check_branch
        %113 = sbr.rel (%p110) target = $region12
      $region11: #{model_forward.5} parent=5 // pred_region
        %s114 = ssub.s32 %s8, 1
        // Predicated region
        $region13: #{model_forward.5} parent=11 // pred_check
          %p115 = pneg %p46
        $region14: #{model_forward.5} parent=11 // pred_check_branch
          %117 = sbr.rel (%p115) target = $region16
        $region15: #{model_forward.5} parent=11 // pred_region
          %s118 = smul.u32 2, %s17
          %p119 = scmp.lt.s32.totalorder %s118, 1
          %s120 = scalar_select %p119, %s118, 1
          %s121 = smul.addr %s120, 8
          %s122 = scalar_lea.vmem %s0, %s121
          %s123 = smul.u32 2, %s17
        $region16: #{model_forward.5} parent=11 // pred_fallthru
          _
      $region12: #{model_forward.5} parent=5 // pred_fallthru
        _
      %p124 = scmp.lt.s32.totalorder %s8, 2
      // Predicated region
      $region17: #{model_forward.5} parent=5 // pred_check
        %p125 = pneg %p124
      $region18: #{model_forward.5} parent=5 // pred_check_branch
        %127 = sbr.rel (%p125) target = $region20
      $region19: #{model_forward.5} parent=5 // pred_region
        // Predicated region
        $region21: #{model_forward.5} parent=19 // pred_check
          %p128 = pneg %p68
        $region22: #{model_forward.5} parent=19 // pred_check_branch
          %130 = sbr.rel (%p128) target = $region24
        $region23: #{model_forward.5} parent=19 // pred_region
          %s131 = sand.u32 %s58, 1
          %s132 = sand.u32 %s58, 1
          %s133 = smul.addr %s132, 8
          %s134 = scalar_lea.vmem [#allocation5], %s133
          %s135 = smul.u32 2, %s15
          %s136 = smul.addr %s135, 2
          %s137 = sadd.s32 %s16, %s136
          %s138 = smul.addr %s137, 4
          %s139 = scalar_lea.vmem %s1, %s138
          // Predicated region
          $region25: #{model_forward.5} parent=23 // pred_check
            _
          $region26: #{model_forward.5} parent=23 // pred_check_branch
            %141 = sbr.rel (0) target = $region28
          $region27: #{model_forward.5} parent=23 // pred_region
            // Predicated region
            $region29: #{model_forward.5} parent=27 // pred_check
              _
            $region30: #{model_forward.5} parent=27 // pred_check_branch
              %143 = sbr.rel target = $region32
            $region31: #{model_forward.5} parent=27 // pred_region
              // Predicated region
              $region44: #{model_forward.5} parent=31 // pred_check
                _
              $region45: #{model_forward.5} parent=31 // pred_check_branch
                %161 = sbr.rel (0) target = $region47
              $region46: #{model_forward.5} parent=31 // pred_region
                loop: start=0, step=1, limit=1
                $region48: #{model_forward.5} parent=46 // loop_pre_header
                  _
                $region49: #{model_forward.5} parent=46 // loop_header
                  %s163 = sphi 0, %s167
                  %p164 = scmp.ge.s32.totalorder %s163, 1
                  %s168 = sphi %s139, %s139
                  %s169 = sphi %s134, %s134
                $region50: #{model_forward.5} parent=46 // loop_header_branch
                  %166 = sbr.rel (%p164) target = $region54
                $region51: #{model_forward.5} parent=46 // loop_body
                  _
                $region52: #{model_forward.5} parent=46 // loop_footer
                  %s167 = sadd.s32 1, %s163
                $region53: #{model_forward.5} parent=46 // loop_footer_branch
                  %162 = sbr.rel target = $region49
                $region54: #{model_forward.5} parent=46 // loop_exit
                  _
                %s171 = ssub.s32 16, 1
                loop: start=0, step=1, limit=1
                $region55: #{model_forward.5} parent=46 // loop_pre_header
                  _
                $region56: #{model_forward.5} parent=46 // loop_header
                  %s173 = sphi 0, %s177
                  %p174 = scmp.ge.s32.totalorder %s173, 1
                  %s178 = sphi %s139, %s139
                  %s179 = sphi %s134, %s134
                $region57: #{model_forward.5} parent=46 // loop_header_branch
                  %176 = sbr.rel (%p174) target = $region61
                $region58: #{model_forward.5} parent=46 // loop_body
                  %v180 = vld [vmem:[%s178] sm:%s171]
                  %181 = vst [vmem:[%s179] sm:%s171] %v180
                  %v182 = vld [vmem:[%s178 + $0x8] sm:%s171]
                  %183 = vst [vmem:[%s179 + $0x4] sm:%s171] %v182
                $region59: #{model_forward.5} parent=46 // loop_footer
                  %s177 = sadd.s32 1, %s173
                $region60: #{model_forward.5} parent=46 // loop_footer_branch
                  %172 = sbr.rel target = $region56
                $region61: #{model_forward.5} parent=46 // loop_exit
                  _
              $region47: #{model_forward.5} parent=31 // pred_fallthru
                _
            $region32: #{model_forward.5} parent=27 // pred_fallthru
              _
            // Predicated region
            $region33: #{model_forward.5} parent=27 // pred_check
              _
            $region34: #{model_forward.5} parent=27 // pred_check_branch
              %145 = sbr.rel (0) target = $region36
            $region35: #{model_forward.5} parent=27 // pred_region
              %s147 = ssub.s32 16, 1
              loop: start=0, step=1, limit=1
              $region37: #{model_forward.5} parent=35 // loop_pre_header
                _
              $region38: #{model_forward.5} parent=35 // loop_header
                %s149 = sphi 0, %s153
                %p150 = scmp.ge.s32.totalorder %s149, 1
                %s154 = sphi %s139, %s139
                %s155 = sphi %s134, %s134
              $region39: #{model_forward.5} parent=35 // loop_header_branch
                %152 = sbr.rel (%p150) target = $region43
              $region40: #{model_forward.5} parent=35 // loop_body
                %v156 = vld [vmem:[%s154] sm:%s147]
                %157 = vst [vmem:[%s155] sm:%s147] %v156
                %v158 = vld [vmem:[%s154 + $0x8] sm:%s147]
                %159 = vst [vmem:[%s155 + $0x4] sm:%s147] %v158
              $region41: #{model_forward.5} parent=35 // loop_footer
                %s153 = sadd.s32 1, %s149
              $region42: #{model_forward.5} parent=35 // loop_footer_branch
                %148 = sbr.rel target = $region38
              $region43: #{model_forward.5} parent=35 // loop_exit
                _
            $region36: #{model_forward.5} parent=27 // pred_fallthru
              _
          $region28: #{model_forward.5} parent=23 // pred_fallthru
            _
          %184 = vnop
        $region24: #{model_forward.5} parent=19 // pred_fallthru
          _
      $region20: #{model_forward.5} parent=5 // pred_fallthru
        _
      %p185 = scmp.le.s32.totalorder 1, %s8
      %p186 = scmp.lt.s32.totalorder %s8, 3
      %p187 = pnand %p185, %p186
      %p188 = pneg %p187
      // Predicated region
      $region62: #{model_forward.5} parent=5 // pred_check
        _
      $region63: #{model_forward.5} parent=5 // pred_check_branch
        %190 = sbr.rel (%p187) target = $region65
      $region64: #{model_forward.5} parent=5 // pred_region
        %s191 = ssub.s32 %s8, 1
        %s192 = sand.u32 %s61, 1
        %s193 = sand.u32 %s61, 1
        %s194 = smul.addr %s193, 8
        %s195 = scalar_lea.vmem [#allocation5], %s194
        // Predicated region
        $region66: #{model_forward.5} parent=64 // pred_check
          %p196 = pneg %p74
        $region67: #{model_forward.5} parent=64 // pred_check_branch
          %198 = sbr.rel (%p196) target = $region69
        $region68: #{model_forward.5} parent=64 // pred_region
          _
        $region69: #{model_forward.5} parent=64 // pred_fallthru
          _
        %s199 = smul.u32 2, %s17
        %p200 = scmp.lt.s32.totalorder %s199, 1
        %s201 = scalar_select %p200, %s199, 1
        %s202 = smul.addr %s201, 8
        %s203 = scalar_lea.vmem %s0, %s202
        %p204 = pneg %p46
        %p205 = pneg %p43
        %s206 = sand.u32 %s61, 1
        %s207 = sand.u32 %s61, 1
        %s208 = smul.addr %s207, 8
        %s209 = scalar_lea.vmem [#allocation5], %s208
        %p210 = pneg %p74
        %p211 = pneg %p71
        %p212 = pneg %p100
        %p213 = pneg %p97
        %p214 = scmp.lt.s32.totalorder %s17, 0
        %s215 = scalar_select %p214, %s17, 0
        %s216 = scalar_lea.vmem %s2, %s215
        %s217 = smul.u32 2, %s17
        %p218 = scmp.lt.s32.totalorder %s217, 1
        %s219 = scalar_select %p218, %s217, 1
        %s220 = smul.addr %s219, 8
        %s221 = scalar_lea.vmem %s0, %s220
        %s222 = smul.u32 2, %s17
        %s223 = smul.u32 2, %s17
        %p224 = scmp.lt.s32.totalorder %s17, 0
        %s225 = scalar_select %p224, %s17, 0
        %s226 = scalar_lea.vmem %s2, %s225
        %p227 = scmp.eq.s32.totalorder %s18, 0
        // Predicated region
        $region70: #{model_forward.5} parent=64 // pred_check
          %p228 = pneg %p227
        $region71: #{model_forward.5} parent=64 // pred_check_branch
          %230 = sbr.rel (%p228) target = $region73
        $region72: #{model_forward.5} parent=64 // pred_region
          %vm231 = vcmask 7168
          %232 = vst.msk [vmem:[#allocation2] sm:$0xff] %vm231, -inf
          %233 = vst.msk [vmem:[#allocation2 + $0x8] sm:$0xff] %vm231, -inf
          %234 = vst.msk [vmem:[#allocation3] sm:$0xff] %vm231, 0.0
          %235 = vst.msk [vmem:[#allocation3 + $0x8] sm:$0xff] %vm231, 0.0
          %236 = vst.msk [vmem:[#allocation4] sm:$0xff] %vm231, 0.0
          %237 = vst.msk [vmem:[#allocation4 + $0x8] sm:$0xff] %vm231, 0.0
        $region73: #{model_forward.5} parent=64 // pred_fallthru
          _
        %v238 = vld [vmem:[%s195] sm:$0xf]
        %v239 = vld [vmem:[%s195 + $0x4] sm:$0xf]
        %v240 = vunpack.c.l.bf16 %v238
        %v241 = vunpack.c.l.bf16 %v239
        %v242 = vld [vmem:[%s221] sm:$0xff]
        %v243 = vld [vmem:[%s221 + $0x8] sm:$0xff]
        %v244 = vld [vmem:[#allocation2] sm:$0xff]
        %v245 = vld [vmem:[#allocation2 + $0x8] sm:$0xff]
        %246 = vmax.xlane.f32.xlu0 %v240
        %v247 = vpop.xlane.xlu0 %246
        %248 = vmax.xlane.f32.xlu0 %v241
        %v249 = vpop.xlane.xlu0 %248
        %v250 = vmax.f32 %v244, %v247
        %v251 = vmax.f32 %v245, %v249
        %v252 = vld [vmem:[#allocation3] sm:$0xff]
        %v253 = vld [vmem:[#allocation3 + $0x8] sm:$0xff]
        %v254 = vsub.f32 %v244, %v250
        %v255 = vsub.f32 %v245, %v251
        %v256 = vmul.f32 %v254, 1.442695
        %v257 = vpow.pop %v256
        %v258 = vmul.f32 %v255, 1.442695
        %v259 = vpow.pop %v258
        %v260 = vmul.f32 %v252, %v257
        %v261 = vmul.f32 %v253, %v259
        %263 = vset.pattern.permute.xlu0 0
        %264 = vperm.xlu0 %263, %v250
        %v265 = vpop.permute.xlu0 %264
        %268 = vset.pattern.permute.xlu0 0
        %269 = vperm.xlu0 %268, %v251
        %v270 = vpop.permute.xlu0 %269
        %v272 = vsub.f32 %v240, %v265
        %v273 = vsub.f32 %v241, %v270
        %v274 = vmul.f32 %v272, 1.442695
        %v275 = vpow.pop %v274
        %v276 = vmul.f32 %v273, 1.442695
        %v277 = vpow.pop %v276
        %278 = vadd.xlane.f32.xlu0 %v275
        %v279 = vpop.xlane.xlu0 %278
        %280 = vadd.xlane.f32.xlu0 %v277
        %v281 = vpop.xlane.xlu0 %280
        %v282 = vadd.f32 %v260, %v279
        %v283 = vadd.f32 %v261, %v281
        %vm284 = vcmask 7168
        %285 = vst.msk [vmem:[#allocation3] sm:$0xff] %vm284, %v282
        %286 = vst.msk [vmem:[#allocation3 + $0x8] sm:$0xff] %vm284, %v283
        %287 = vst.msk [vmem:[#allocation2] sm:$0xff] %vm284, %v250
        %288 = vst.msk [vmem:[#allocation2 + $0x8] sm:$0xff] %vm284, %v251
        %v289 = vlaneseq
        %v290 = vand.u32 %v289, 127
        %s291 = smul.u32 %s18, 128
        %v292 = vstv %s291
        %v293 = vadd.s32 %v290, %v292
        %v294 = vld [vmem:[#allocation4] sm:$0xff]
        %v295 = vld [vmem:[#allocation4 + $0x8] sm:$0xff]
        %296 = vset.pattern.permute.xlu0 0
        %297 = vperm.xlu0 %296, %v242
        %v298 = vpop.permute.xlu0 %297
        %299 = vset.pattern.permute.xlu0 0
        %300 = vperm.xlu0 %299, %v243
        %v301 = vpop.permute.xlu0 %300
        %vm302 = vcmp.eq.s32.totalorder %v293, %v298
        %vm303 = vcmp.eq.s32.totalorder %v293, %v301
        %v304 = vsel %vm302, %v240, 0.0
        %v305 = vsel %vm303, %v241, 0.0
        %306 = vadd.xlane.f32.xlu0 %v304
        %v307 = vpop.xlane.xlu0 %306
        %308 = vadd.xlane.f32.xlu0 %v305
        %v309 = vpop.xlane.xlu0 %308
        %v310 = vadd.f32 %v294, %v307
        %v311 = vadd.f32 %v295, %v309
        %312 = vst.msk [vmem:[#allocation4] sm:$0xff] %vm284, %v310
        %313 = vst.msk [vmem:[#allocation4 + $0x8] sm:$0xff] %vm284, %v311
        %p314 = scmp.eq.s32.totalorder %s18, 1
        // Predicated region
        $region74: #{model_forward.5} parent=64 // pred_check
          %p315 = pneg %p314
        $region75: #{model_forward.5} parent=64 // pred_check_branch
          %317 = sbr.rel (%p315) target = $region77
        $region76: #{model_forward.5} parent=64 // pred_region
          %v318 = vld [vmem:[#allocation2] sm:$0xff]
          %v319 = vld [vmem:[#allocation2 + $0x8] sm:$0xff]
          %v320 = vld [vmem:[#allocation3] sm:$0xff]
          %v321 = vld [vmem:[#allocation3 + $0x8] sm:$0xff]
          %v322 = vlog2.pop %v320
          %v323 = vmul.f32 %v322, 0.6931472
          %v324 = vlog2.pop %v321
          %v325 = vmul.f32 %v324, 0.6931472
          %v326 = vadd.f32 %v318, %v323
          %v327 = vadd.f32 %v319, %v325
          %v328 = vld [vmem:[#allocation4] sm:$0xff]
          %v329 = vld [vmem:[#allocation4 + $0x8] sm:$0xff]
          %v330 = vsub.f32 %v326, %v328
          %v331 = vsub.f32 %v327, %v329
          %vm332 = vcmp.ne.s32.totalorder %v242, 4294967196
          %vm333 = vcmp.ne.s32.totalorder %v243, 4294967196
          %v334 = vsel %vm332, 1, 0
          %v335 = vsel %vm333, 1, 0
          %v336 = vcvt.s32.f32 %v334
          %v337 = vcvt.s32.f32 %v335
          %v338 = vmul.f32 %v330, %v336
          %v339 = vmul.f32 %v331, %v337
          %v340 = vsel %vm284, %v338, 0.0
          %v341 = vsel %vm284, %v339, 0.0
          %v342 = vadd.f32 %v340, %v341
          %343 = vadd.xlane.f32.xlu0 %v342
          %v344 = vpop.xlane.xlu0 %343
          %v345 = vrot.slane %v344, 4
          %v346 = vadd.f32 %v344, %v345
          %v347 = vrot.slane %v346, 2
          %v348 = vadd.f32 %v346, %v347
          %v349 = vrot.slane %v348, 1
          %v350 = vadd.f32 %v348, %v349
          %s351 = vtos %v350
          %v352 = vsel %vm284, %v336, 0.0
          %v353 = vsel %vm284, %v337, 0.0
          %v354 = vadd.f32 %v352, %v353
          %355 = vadd.xlane.f32.xlu0 %v354
          %v356 = vpop.xlane.xlu0 %355
          %v357 = vrot.slane %v356, 4
          %v358 = vadd.f32 %v356, %v357
          %v359 = vrot.slane %v358, 2
          %v360 = vadd.f32 %v358, %v359
          %v361 = vrot.slane %v360, 1
          %v362 = vadd.f32 %v360, %v361
          %s363 = vtos %v362
          %vm364 = vcmp.eq.s32.totalorder %v290, 0
          %vm365 = vcmp.eq.s32.totalorder %v290, 1
          %v366 = vstv %s363
          %v367 = vsel %vm365, %v366, 0.0
          %v368 = vstv %s351
          %v369 = vsel %vm364, %v368, %v367
          %370 = vst [vmem:[%s226] sm:$0x1] %v369
        $region77: #{model_forward.5} parent=64 // pred_fallthru
          _
        %p371 = scmp.lt.s32.totalorder %s17, 0
        %s372 = scalar_select %p371, %s17, 0
        %s373 = scalar_lea.vmem %s2, %s372
        // Predicated region
        $region78: #{model_forward.5} parent=64 // pred_check
          %p374 = pneg %p97
        $region79: #{model_forward.5} parent=64 // pred_check_branch
          %376 = sbr.rel (%p374) target = $region81
        $region80: #{model_forward.5} parent=64 // pred_region
          _
        $region81: #{model_forward.5} parent=64 // pred_fallthru
          _
        // Predicated region
        $region82: #{model_forward.5} parent=64 // pred_check
          %p377 = pneg %p97
        $region83: #{model_forward.5} parent=64 // pred_check_branch
          %379 = sbr.rel (%p377) target = $region85
        $region84: #{model_forward.5} parent=64 // pred_region
          %p380 = scmp.lt.s32.totalorder %s17, 0
          %s381 = scalar_select %p380, %s17, 0
          %s382 = scalar_lea.vmem %s2, %s381
        $region85: #{model_forward.5} parent=64 // pred_fallthru
          _
      $region65: #{model_forward.5} parent=5 // pred_fallthru
        _
      %p383 = scmp.le.s32.totalorder 2, %s8
      // Predicated region
      $region86: #{model_forward.5} parent=5 // pred_check
        %p384 = pneg %p383
      $region87: #{model_forward.5} parent=5 // pred_check_branch
        %386 = sbr.rel (%p384) target = $region89
      $region88: #{model_forward.5} parent=5 // pred_region
        %s387 = ssub.s32 %s8, 2
      $region89: #{model_forward.5} parent=5 // pred_fallthru
        _
    $region6: #{model_forward.5} parent=1 // loop_footer
      %s12 = sadd.s32 1, %s8
    $region7: #{model_forward.5} parent=1 // loop_footer_branch
      %7 = sbr.rel target = $region3
    $region8: #{model_forward.5} parent=1 // loop_exit
      _

// kernel: model_forward.3
$region0: #{model_forward.3}
  #allocation0 [shape = 'u32[]', space=smem, size = 0x4, offset = 0x4, fixed_abs, tag = 'smem constant byte address 0x4 - core index']
  #allocation1 [shape = 'u32[144,128]{1,0:T(1,128)}', space=vmem, size = 0x12000, scoped, tag = 'internal scratch']
  %s0 = inlined_call_operand.vmem [shape: bf16[32,32], index: 0, kind: input, shape index: {}]
  %s1 = inlined_call_operand.vmem [shape: bf16[32,32], index: 1, kind: input, shape index: {}]
  %s2 = inlined_call_operand.vmem [shape: f32[1,32], index: 2, kind: input, shape index: {}]
  %s3 = inlined_call_operand.vmem [shape: bf16[32,16], index: 3, kind: input, shape index: {}]
  %s4 = inlined_call_operand.vmem [shape: f32[1,16], index: 4, kind: input, shape index: {}]
  %s5 = inlined_call_operand.vmem [shape: bf16[32,16], index: 5, kind: output, shape index: {}]
  %s6 = sld [smem:[#allocation0]]
  $region30: #{model_forward.3} parent=0
    _
  %s8 = ssub.s32 1, %s6
  %s9 = scalar_select 0, %s8, %s6
  // Predicated region
  $region2: #{model_forward.3} parent=0 // pred_check
    _
  $region3: #{model_forward.3} parent=0 // pred_check_branch
    %11 = sbr.rel (0) target = $region5
  $region4: #{model_forward.3} parent=0 // pred_region
    _
  $region5: #{model_forward.3} parent=0 // pred_fallthru
    _
  // Predicated region
  $region6: #{model_forward.3} parent=0 // pred_check
    _
  $region7: #{model_forward.3} parent=0 // pred_check_branch
    %13 = sbr.rel (0) target = $region9
  $region8: #{model_forward.3} parent=0 // pred_region
    _
  $region9: #{model_forward.3} parent=0 // pred_fallthru
    _
  // Predicated region
  $region10: #{model_forward.3} parent=0 // pred_check
    _
  $region11: #{model_forward.3} parent=0 // pred_check_branch
    %15 = sbr.rel (0) target = $region13
  $region12: #{model_forward.3} parent=0 // pred_region
    _
  $region13: #{model_forward.3} parent=0 // pred_fallthru
    _
  // Predicated region
  $region14: #{model_forward.3} parent=0 // pred_check
    _
  $region15: #{model_forward.3} parent=0 // pred_check_branch
    %17 = sbr.rel (0) target = $region17
  $region16: #{model_forward.3} parent=0 // pred_region
    _
  $region17: #{model_forward.3} parent=0 // pred_fallthru
    _
  // Predicated region
  $region18: #{model_forward.3} parent=0 // pred_check
    _
  $region19: #{model_forward.3} parent=0 // pred_check_branch
    %19 = sbr.rel (0) target = $region21
  $region20: #{model_forward.3} parent=0 // pred_region
    _
  $region21: #{model_forward.3} parent=0 // pred_fallthru
    _
  %v21 = vld [vmem:[%s0] sm:$0xf]
  %v22 = vld [vmem:[%s0 + $0x4] sm:$0xf]
  %v23 = vld [vmem:[%s0 + $0x8] sm:$0xf]
  %v24 = vld [vmem:[%s0 + $0xc] sm:$0xf]
  %v25 = vld [vmem:[%s1] sm:$0xf]
  %v26 = vld [vmem:[%s1 + $0x4] sm:$0xf]
  %v27 = vld [vmem:[%s1 + $0x8] sm:$0xf]
  %v28 = vld [vmem:[%s1 + $0xc] sm:$0xf]
  %v29 = vld [vmem:[%s2] sm:$0x1]
  %v31 = vlaneseq
  %v32 = vshrl.u32 %v31, 7
  %v33 = vsub.s32 0, %v32
  %v34 = vrot.slane %v29, %v33
  %v40 = vunpack.c.l.b16 %v21
  %v41 = vunpack.c.l.b16 %v22
  %v42 = vunpack.c.l.b16 %v23
  %v43 = vunpack.c.l.b16 %v24
  %v44 = vpack.c.b16 %v41, %v40
  %v45 = vpack.c.b16 %v43, %v42
  %v50 = vunpack.c.l.b16 %v25
  %v51 = vunpack.c.l.b16 %v26
  %v52 = vunpack.c.l.b16 %v27
  %v53 = vunpack.c.l.b16 %v28
  %v54 = vpack.c.b16 %v51, %v50
  %v55 = vpack.c.b16 %v53, %v52
  %vm58 = vcmask 261120
  %v60 = vsel %vm58, %v44, 0
  %v63 = vsel %vm58, %v45, 0
  %65 = vmatprep.subr.bf16.mxu0 0
  %66 = vmatpush1.bf16.msra.mxu0 0
  %67 = vmatprep.subr.bf16.mxu0 0
  %68 = vmatpush1.bf16.msra.mxu0 0
  %69 = vmatprep.subr.bf16.mxu0 0
  %70 = vmatpush1.bf16.msra.mxu0 0
  %71 = vmatprep.subr.bf16.mxu0 0
  %72 = vmatpush1.bf16.msra.mxu0 0
  %73 = vmatprep.subr.bf16.mxu0 0
  %74 = vmatpush1.bf16.msra.mxu0 0
  %75 = vmatprep.subr.bf16.mxu0 0
  %76 = vmatpush1.bf16.msra.mxu0 0
  %77 = vmatprep.subr.bf16.mxu0 0
  %78 = vmatpush1.bf16.msra.mxu0 %v55
  %79 = vmatprep.subr.bf16.mxu0 0
  %80 = vmatpush1.bf16.msra.mxu0 %v54
  %81 = vmatprep.subr.bf16.mxu0 0
  %82 = vmatpush2.bf16.msra.mxu0 0
  %83 = vmatprep.subr.bf16.mxu0 0
  %84 = vmatpush2.bf16.msra.mxu0 0
  %85 = vmatprep.subr.bf16.mxu0 0
  %86 = vmatpush2.bf16.msra.mxu0 0
  %87 = vmatprep.subr.bf16.mxu0 0
  %88 = vmatpush2.bf16.msra.mxu0 0
  %89 = vmatprep.subr.bf16.mxu0 0
  %90 = vmatpush2.bf16.msra.mxu0 0
  %91 = vmatprep.subr.bf16.mxu0 0
  %92 = vmatpush2.bf16.msra.mxu0 0
  %93 = vmatprep.subr.bf16.mxu0 0
  %94 = vmatpush2.bf16.msra.mxu0 0
  %95 = vmatprep.subr.bf16.mxu0 0
  %96 = vmatpush2.bf16.msra.mxu0 0
  %97 = vmatprep.mubr.bf16.mxu0 0
  %98 = vmatmul.mubr.bf16.gmra.mxu0 %v60
  %v99 = vpop.f32.mrf.mxu0
  %v100 = vadd.f32 %v34, %v99
  %v101 = vpop.f32.mrf.mxu0
  %v102 = vpop.f32.mrf.mxu0
  %v103 = vadd.f32 %v34, %v102
  %v104 = vpop.f32.mrf.mxu0
  %105 = vmatprep.mubr.bf16.mxu0 0
  %106 = vmatmul.mubr.bf16.gmra.mxu0 %v63
  %v107 = vpop.f32.mrf.mxu0
  %v108 = vadd.f32 %v34, %v107
  %v109 = vpop.f32.mrf.mxu0
  %v110 = vpop.f32.mrf.mxu0
  %v111 = vadd.f32 %v34, %v110
  %v112 = vpop.f32.mrf.mxu0
  %113 = vdwg.mxu0
  %v114 = vmax.f32 %v100, 0.0
  %v115 = vmax.f32 %v103, 0.0
  %v116 = vmax.f32 %v108, 0.0
  %v117 = vmax.f32 %v111, 0.0
  %v118 = vpack.c.bf16 %v115, %v114
  %v119 = vpack.c.bf16 %v117, %v116
  %v120 = vld [vmem:[%s3] sm:$0xf]
  %v121 = vld [vmem:[%s3 + $0x4] sm:$0xf]
  %v122 = vld [vmem:[%s3 + $0x8] sm:$0xf]
  %v123 = vld [vmem:[%s3 + $0xc] sm:$0xf]
  %v124 = vld [vmem:[%s4] sm:$0x1]
  %v126 = vlaneseq
  %v127 = vshrl.u32 %v126, 7
  %v128 = vsub.s32 0, %v127
  %v129 = vrot.slane %v124, %v128
  %v135 = vunpack.c.l.b16 %v120
  %v136 = vunpack.c.l.b16 %v121
  %v137 = vunpack.c.l.b16 %v122
  %v138 = vunpack.c.l.b16 %v123
  %v139 = vpack.c.b16 %v136, %v135
  %v140 = vpack.c.b16 %v138, %v137
  %v144 = vsel %vm58, %v118, 0
  %v147 = vsel %vm58, %v119, 0
  %149 = vmatprep.subr.bf16.mxu0 0
  %150 = vmatpush1.bf16.msra.mxu0 0
  %151 = vmatprep.subr.bf16.mxu0 0
  %152 = vmatpush1.bf16.msra.mxu0 0
  %153 = vmatprep.subr.bf16.mxu0 0
  %154 = vmatpush1.bf16.msra.mxu0 0
  %155 = vmatprep.subr.bf16.mxu0 0
  %156 = vmatpush1.bf16.msra.mxu0 0
  %157 = vmatprep.subr.bf16.mxu0 0
  %158 = vmatpush1.bf16.msra.mxu0 0
  %159 = vmatprep.subr.bf16.mxu0 0
  %160 = vmatpush1.bf16.msra.mxu0 0
  %161 = vmatprep.subr.bf16.mxu0 0
  %162 = vmatpush1.bf16.msra.mxu0 %v140
  %163 = vmatprep.subr.bf16.mxu0 0
  %164 = vmatpush1.bf16.msra.mxu0 %v139
  %165 = vmatprep.subr.bf16.mxu0 0
  %166 = vmatpush2.bf16.msra.mxu0 0
  %167 = vmatprep.subr.bf16.mxu0 0
  %168 = vmatpush2.bf16.msra.mxu0 0
  %169 = vmatprep.subr.bf16.mxu0 0
  %170 = vmatpush2.bf16.msra.mxu0 0
  %171 = vmatprep.subr.bf16.mxu0 0
  %172 = vmatpush2.bf16.msra.mxu0 0
  %173 = vmatprep.subr.bf16.mxu0 0
  %174 = vmatpush2.bf16.msra.mxu0 0
  %175 = vmatprep.subr.bf16.mxu0 0
  %176 = vmatpush2.bf16.msra.mxu0 0
  %177 = vmatprep.subr.bf16.mxu0 0
  %178 = vmatpush2.bf16.msra.mxu0 0
  %179 = vmatprep.subr.bf16.mxu0 0
  %180 = vmatpush2.bf16.msra.mxu0 0
  %181 = vmatprep.mubr.bf16.mxu0 0
  %182 = vmatmul.mubr.bf16.gmra.mxu0 %v144
  %v183 = vpop.f32.mrf.mxu0
  %v184 = vadd.f32 %v129, %v183
  %v185 = vpop.f32.mrf.mxu0
  %v186 = vpop.f32.mrf.mxu0
  %v187 = vadd.f32 %v129, %v186
  %v188 = vpop.f32.mrf.mxu0
  %189 = vmatprep.mubr.bf16.mxu0 0
  %190 = vmatmul.mubr.bf16.gmra.mxu0 %v147
  %v191 = vpop.f32.mrf.mxu0
  %v192 = vadd.f32 %v129, %v191
  %v193 = vpop.f32.mrf.mxu0
  %v194 = vpop.f32.mrf.mxu0
  %v195 = vadd.f32 %v129, %v194
  %v196 = vpop.f32.mrf.mxu0
  %197 = vdwg.mxu0
  %v198 = vpack.c.bf16 %v187, %v184
  %v199 = vpack.c.bf16 %v195, %v192
  %v202 = vunpack.c.l.b16 %v198
  %v203 = vunpack.c.h.b16 %v198
  %v204 = vunpack.c.l.b16 %v199
  %v205 = vunpack.c.h.b16 %v199
  %v206 = vpack.c.b16 %v202, %v202
  %v207 = vpack.c.b16 %v203, %v203
  %v208 = vpack.c.b16 %v204, %v204
  %v209 = vpack.c.b16 %v205, %v205
  %vm214 = vcmask 125952
  %215 = vst.msk [vmem:[%s5] sm:$0xf] %vm214, %v206
  %216 = vst.msk [vmem:[%s5 + $0x4] sm:$0xf] %vm214, %v207
  %217 = vst.msk [vmem:[%s5 + $0x8] sm:$0xf] %vm214, %v208
  %218 = vst.msk [vmem:[%s5 + $0xc] sm:$0xf] %vm214, %v209
  // Predicated region
  $region22: #{model_forward.3} parent=0 // pred_check
    _
  $region23: #{model_forward.3} parent=0 // pred_check_branch
    %220 = sbr.rel (0) target = $region25
  $region24: #{model_forward.3} parent=0 // pred_region
    _
  $region25: #{model_forward.3} parent=0 // pred_fallthru
    _
  // Predicated region
  $region26: #{model_forward.3} parent=0 // pred_check
    _
  $region27: #{model_forward.3} parent=0 // pred_check_branch
    %222 = sbr.rel (0) target = $region29
  $region28: #{model_forward.3} parent=0 // pred_region
    _
  $region29: #{model_forward.3} parent=0 // pred_fallthru
    _

// kernel: model_forward.4
$region0: #{model_forward.4}
  #allocation0 [shape = 'u32[]', space=smem, size = 0x4, offset = 0x4, fixed_abs, tag = 'smem constant byte address 0x4 - core index']
  #allocation1 [shape = 'u32[144,128]{1,0:T(1,128)}', space=vmem, size = 0x12000, scoped, tag = 'internal scratch']
  #allocation2 [shape = 'f32[16,1]{1,0:T(8,128)}', space=vmem, size = 0x2000, scoped, tag = 'scratch operand']
  #allocation3 [shape = 'f32[16,1]{1,0:T(8,128)}', space=vmem, size = 0x2000, scoped, tag = 'scratch operand']
  #allocation4 [shape = 'f32[16,1]{1,0:T(8,128)}', space=vmem, size = 0x2000, scoped, tag = 'scratch operand']
  #allocation5 [shape = 'f32[16,1]{1,0:T(8,128)}', space=vmem, size = 0x2000, scoped, tag = 'scratch operand']
  #allocation6 [shape = 's32[1]{0}', space=sflag, size = 0x4, scoped, tag = 'scoped memory for model_forward.4']
  #allocation7 [shape = 'u8[512]{0}', space=smem, size = 0x200, scoped, tag = 'prefetched SMEM operand 0']
  #allocation8 [shape = 'u8[512]{0}', space=smem, size = 0x200, scoped, tag = 'prefetched SMEM operand 1']
  %s0 = inlined_call_operand.vmem [shape: s32[2], index: 0, kind: input, shape index: {}]
  %s1 = inlined_call_operand.vmem [shape: s32[2], index: 1, kind: input, shape index: {}]
  %s2 = inlined_call_operand.vmem [shape: bf16[2,16,16], index: 2, kind: input, shape index: {}]
  %s3 = inlined_call_operand.vmem [shape: bf16[2,16,256], index: 3, kind: input, shape index: {}]
  %s4 = inlined_call_operand.vmem [shape: bf16[2,16,256], index: 4, kind: input, shape index: {}]
  %s5 = inlined_call_operand.vmem [shape: bf16[2,16,256], index: 5, kind: output, shape index: {0}]
  %s6 = inlined_call_operand.vmem [shape: f32[2,1,128], index: 6, kind: output, shape index: {1}]
  %7 = xla_tuple %s5, %s6
  %s8 = sld [smem:[#allocation0]]
  $region180: #{model_forward.4} parent=0
    _
  %s10 = ssub.s32 1, %s8
  %s11 = scalar_select 0, %s10, %s8
  %s12 = sshll.u32 %s0, 4
  %s13 = int_to_ptr.vmem [resolvable:$true] %s12
  %15 = dma.vmem_to_smem %s13, 16, [#allocation7], [#allocation6]
  %s16 = sshll.u32 %s1, 4
  %s17 = int_to_ptr.vmem [resolvable:$true] %s16
  %19 = dma.vmem_to_smem %s17, 16, [#allocation8], [#allocation6]
  %20 = dma.done [#allocation6], 32
  %21 = sfence
  $region1: #{model_forward.4} parent=0
    #allocation9 [shape = 'u8[8192]{0}', space=vmem, size = 0x2000, scoped, tag = 'input window, operand 3']
    #allocation10 [shape = 'u8[8192]{0}', space=vmem, size = 0x2000, scoped, tag = 'input window, operand 4']
    #allocation11 [shape = 'u8[8192]{0}', space=vmem, size = 0x2000, scoped, tag = 'output window, operand 0']
    loop: start=0, step=1, limit=6
    $region2: #{model_forward.4} parent=1 // loop_pre_header
      _
    $region3: #{model_forward.4} parent=1 // loop_header
      %s23 = sphi 0, %s27
      %p24 = scmp.ge.s32.totalorder %s23, 6
      %s30 = sphi 0, %s42
      %s31 = sphi 0, %s38
      %s32 = sphi 0, %s30
      %s33 = sphi 0, %s31
      %s34 = sphi 0, %s32
      %s35 = sphi 0, %s33
      %s45 = sphi 0, %s47
      %s48 = sphi 0, %s45
      %s49 = sphi 0, %s48
      %s65 = sphi 0, %s49
      %s73 = sphi 0, %s75
      %s76 = sphi 0, %s73
      %s77 = sphi 0, %s76
      %s93 = sphi 0, %s77
      %s101 = sphi 0, %s103
      %s104 = sphi 0, %s101
      %s105 = sphi 0, %s104
      %s121 = sphi 0, %s105
      %s129 = sphi 0, %s131
      %s132 = sphi 0, %s129
      %s133 = sphi 0, %s132
      %s149 = sphi 0, %s133
      %s155 = sphi 0, %s157
      %s158 = sphi 0, %s155
      %s159 = sphi 0, %s158
      %s175 = sphi 0, %s159
    $region4: #{model_forward.4} parent=1 // loop_header_branch
      %26 = sbr.rel (%p24) target = $region8
    $region5: #{model_forward.4} parent=1 // loop_body
      %s28 = ssub.s32 %s23, 1
      %s29 = ssub.s32 %s23, 2
      %s36 = sadd.s32 1, %s31
      %p37 = scmp.ge.s32.totalorder %s36, 2
      %s38 = scalar_select %p37, 0, %s36
      %s39 = sadd.s32 1, %s30
      %s40 = scalar_select %p37, %s39, %s30
      %p41 = scmp.ge.s32.totalorder %s40, 2
      %s42 = scalar_select %p41, 0, %s40
      %s43 = ssub.s32 %s30, %s42
      %p44 = scmp.eq.s32.totalorder %s43, 0
      %s46 = sadd.s32 %s45, 1
      %s47 = scalar_select %p44, %s45, %s46
      %p50 = pneg %p44
      %p51 = scmp.eq.s32.totalorder %s23, 3
      %p52 = por %p50, %p51
      %p53 = scmp.ne.s32.totalorder %s45, %s48
      %p54 = scmp.eq.s32.totalorder %s23, 0
      %p55 = por %p53, %p54
      %p56 = scmp.ne.s32.totalorder %s45, %s48
      %p57 = scmp.eq.s32.totalorder %s28, 3
      %p58 = por %p56, %p57
      %p59 = scmp.ne.s32.totalorder %s48, %s49
      %p60 = scmp.eq.s32.totalorder %s28, 0
      %p61 = por %p59, %p60
      %p62 = scmp.ne.s32.totalorder %s48, %s49
      %p63 = scmp.eq.s32.totalorder %s29, 3
      %p64 = por %p62, %p63
      %p66 = scmp.ne.s32.totalorder %s49, %s65
      %p67 = scmp.eq.s32.totalorder %s29, 0
      %p68 = por %p66, %p67
      %s69 = ssub.s32 %s30, %s42
      %s70 = ssub.s32 %s31, %s38
      %s71 = sor.u32 %s69, %s70
      %p72 = scmp.eq.s32.totalorder %s71, 0
      %s74 = sadd.s32 %s73, 1
      %s75 = scalar_select %p72, %s73, %s74
      %p78 = pneg %p72
      %p79 = scmp.eq.s32.totalorder %s23, 3
      %p80 = por %p78, %p79
      %p81 = scmp.ne.s32.totalorder %s73, %s76
      %p82 = scmp.eq.s32.totalorder %s23, 0
      %p83 = por %p81, %p82
      %p84 = scmp.ne.s32.totalorder %s73, %s76
      %p85 = scmp.eq.s32.totalorder %s28, 3
      %p86 = por %p84, %p85
      %p87 = scmp.ne.s32.totalorder %s76, %s77
      %p88 = scmp.eq.s32.totalorder %s28, 0
      %p89 = por %p87, %p88
      %p90 = scmp.ne.s32.totalorder %s76, %s77
      %p91 = scmp.eq.s32.totalorder %s29, 3
      %p92 = por %p90, %p91
      %p94 = scmp.ne.s32.totalorder %s77, %s93
      %p95 = scmp.eq.s32.totalorder %s29, 0
      %p96 = por %p94, %p95
      %s97 = ssub.s32 %s30, %s42
      %s98 = ssub.s32 %s31, %s38
      %s99 = sor.u32 %s97, %s98
      %p100 = scmp.eq.s32.totalorder %s99, 0
      %s102 = sadd.s32 %s101, 1
      %s103 = scalar_select %p100, %s101, %s102
      %p106 = pneg %p100
      %p107 = scmp.eq.s32.totalorder %s23, 3
      %p108 = por %p106, %p107
      %p109 = scmp.ne.s32.totalorder %s101, %s104
      %p110 = scmp.eq.s32.totalorder %s23, 0
      %p111 = por %p109, %p110
      %p112 = scmp.ne.s32.totalorder %s101, %s104
      %p113 = scmp.eq.s32.totalorder %s28, 3
      %p114 = por %p112, %p113
      %p115 = scmp.ne.s32.totalorder %s104, %s105
      %p116 = scmp.eq.s32.totalorder %s28, 0
      %p117 = por %p115, %p116
      %p118 = scmp.ne.s32.totalorder %s104, %s105
      %p119 = scmp.eq.s32.totalorder %s29, 3
      %p120 = por %p118, %p119
      %p122 = scmp.ne.s32.totalorder %s105, %s121
      %p123 = scmp.eq.s32.totalorder %s29, 0
      %p124 = por %p122, %p123
      %s125 = ssub.s32 %s30, %s42
      %s126 = ssub.s32 %s31, %s38
      %s127 = sor.u32 %s125, %s126
      %p128 = scmp.eq.s32.totalorder %s127, 0
      %s130 = sadd.s32 %s129, 1
      %s131 = scalar_select %p128, %s129, %s130
      %p134 = pneg %p128
      %p135 = scmp.eq.s32.totalorder %s23, 3
      %p136 = por %p134, %p135
      %p137 = scmp.ne.s32.totalorder %s129, %s132
      %p138 = scmp.eq.s32.totalorder %s23, 0
      %p139 = por %p137, %p138
      %p140 = scmp.ne.s32.totalorder %s129, %s132
      %p141 = scmp.eq.s32.totalorder %s28, 3
      %p142 = por %p140, %p141
      %p143 = scmp.ne.s32.totalorder %s132, %s133
      %p144 = scmp.eq.s32.totalorder %s28, 0
      %p145 = por %p143, %p144
      %p146 = scmp.ne.s32.totalorder %s132, %s133
      %p147 = scmp.eq.s32.totalorder %s29, 3
      %p148 = por %p146, %p147
      %p150 = scmp.ne.s32.totalorder %s133, %s149
      %p151 = scmp.eq.s32.totalorder %s29, 0
      %p152 = por %p150, %p151
      %s153 = ssub.s32 %s30, %s42
      %p154 = scmp.eq.s32.totalorder %s153, 0
      %s156 = sadd.s32 %s155, 1
      %s157 = scalar_select %p154, %s155, %s156
      %p160 = pneg %p154
      %p161 = scmp.eq.s32.totalorder %s23, 3
      %p162 = por %p160, %p161
      %p163 = scmp.ne.s32.totalorder %s155, %s158
      %p164 = scmp.eq.s32.totalorder %s23, 0
      %p165 = por %p163, %p164
      %p166 = scmp.ne.s32.totalorder %s155, %s158
      %p167 = scmp.eq.s32.totalorder %s28, 3
      %p168 = por %p166, %p167
      %p169 = scmp.ne.s32.totalorder %s158, %s159
      %p170 = scmp.eq.s32.totalorder %s28, 0
      %p171 = por %p169, %p170
      %p172 = scmp.ne.s32.totalorder %s158, %s159
      %p173 = scmp.eq.s32.totalorder %s29, 3
      %p174 = por %p172, %p173
      %p176 = scmp.ne.s32.totalorder %s159, %s175
      %p177 = scmp.eq.s32.totalorder %s29, 0
      %p178 = por %p176, %p177
      %p179 = scmp.le.s32.totalorder 1, %s23
      %p180 = scmp.lt.s32.totalorder %s23, 5
      %p181 = pnand %p179, %p180
      %p182 = pneg %p181
      // Predicated region
      $region9: #{model_forward.4} parent=5 // pred_check
        _
      $region10: #{model_forward.4} parent=5 // pred_check_branch
        %184 = sbr.rel (%p181) target = $region12
      $region11: #{model_forward.4} parent=5 // pred_region
        %s185 = ssub.s32 %s23, 1
      $region12: #{model_forward.4} parent=5 // pred_fallthru
        _
      %p186 = scmp.lt.s32.totalorder %s23, 4
      // Predicated region
      $region13: #{model_forward.4} parent=5 // pred_check
        %p187 = pneg %p186
      $region14: #{model_forward.4} parent=5 // pred_check_branch
        %189 = sbr.rel (%p187) target = $region16
      $region15: #{model_forward.4} parent=5 // pred_region
        // Predicated region
        $region17: #{model_forward.4} parent=15 // pred_check
          %p190 = pneg %p55
        $region18: #{model_forward.4} parent=15 // pred_check_branch
          %192 = sbr.rel (%p190) target = $region20
        $region19: #{model_forward.4} parent=15 // pred_region
          %p193 = scmp.lt.s32.totalorder %s30, 1
          %s194 = scalar_select %p193, %s30, 1
          %s195 = smul.addr %s194, 2
          %s196 = smul.addr %s195, 4
          %s197 = scalar_lea.vmem %s2, %s196
        $region20: #{model_forward.4} parent=15 // pred_fallthru
          _
        // Predicated region
        $region21: #{model_forward.4} parent=15 // pred_check
          %p198 = pneg %p83
        $region22: #{model_forward.4} parent=15 // pred_check_branch
          %200 = sbr.rel (%p198) target = $region24
        $region23: #{model_forward.4} parent=15 // pred_region
          %s201 = sand.u32 %s73, 1
          %s202 = sand.u32 %s73, 1
          %s203 = smul.addr %s202, 8
          %s204 = scalar_lea.vmem [#allocation9], %s203
          %s205 = smul.addr %s30, 4
          %s206 = sadd.s32 %s31, %s205
          %s207 = smul.addr %s206, 4
          %s208 = scalar_lea.vmem %s3, %s207
          // Predicated region
          $region25: #{model_forward.4} parent=23 // pred_check
            _
          $region26: #{model_forward.4} parent=23 // pred_check_branch
            %210 = sbr.rel (0) target = $region28
          $region27: #{model_forward.4} parent=23 // pred_region
            // Predicated region
            $region29: #{model_forward.4} parent=27 // pred_check
              _
            $region30: #{model_forward.4} parent=27 // pred_check_branch
              %212 = sbr.rel target = $region32
            $region31: #{model_forward.4} parent=27 // pred_region
              // Predicated region
              $region44: #{model_forward.4} parent=31 // pred_check
                _
              $region45: #{model_forward.4} parent=31 // pred_check_branch
                %230 = sbr.rel (0) target = $region47
              $region46: #{model_forward.4} parent=31 // pred_region
                loop: start=0, step=1, limit=1
                $region48: #{model_forward.4} parent=46 // loop_pre_header
                  _
                $region49: #{model_forward.4} parent=46 // loop_header
                  %s232 = sphi 0, %s236
                  %p233 = scmp.ge.s32.totalorder %s232, 1
                  %s237 = sphi %s208, %s208
                  %s238 = sphi %s204, %s204
                $region50: #{model_forward.4} parent=46 // loop_header_branch
                  %235 = sbr.rel (%p233) target = $region54
                $region51: #{model_forward.4} parent=46 // loop_body
                  _
                $region52: #{model_forward.4} parent=46 // loop_footer
                  %s236 = sadd.s32 1, %s232
                $region53: #{model_forward.4} parent=46 // loop_footer_branch
                  %231 = sbr.rel target = $region49
                $region54: #{model_forward.4} parent=46 // loop_exit
                  _
                %s240 = ssub.s32 16, 1
                loop: start=0, step=1, limit=1
                $region55: #{model_forward.4} parent=46 // loop_pre_header
                  _
                $region56: #{model_forward.4} parent=46 // loop_header
                  %s242 = sphi 0, %s246
                  %p243 = scmp.ge.s32.totalorder %s242, 1
                  %s247 = sphi %s208, %s208
                  %s248 = sphi %s204, %s204
                $region57: #{model_forward.4} parent=46 // loop_header_branch
                  %245 = sbr.rel (%p243) target = $region61
                $region58: #{model_forward.4} parent=46 // loop_body
                  %v249 = vld [vmem:[%s247] sm:%s240]
                  %250 = vst [vmem:[%s248] sm:%s240] %v249
                  %v251 = vld [vmem:[%s247 + $0x8] sm:%s240]
                  %252 = vst [vmem:[%s248 + $0x4] sm:%s240] %v251
                $region59: #{model_forward.4} parent=46 // loop_footer
                  %s246 = sadd.s32 1, %s242
                $region60: #{model_forward.4} parent=46 // loop_footer_branch
                  %241 = sbr.rel target = $region56
                $region61: #{model_forward.4} parent=46 // loop_exit
                  _
              $region47: #{model_forward.4} parent=31 // pred_fallthru
                _
            $region32: #{model_forward.4} parent=27 // pred_fallthru
              _
            // Predicated region
            $region33: #{model_forward.4} parent=27 // pred_check
              _
            $region34: #{model_forward.4} parent=27 // pred_check_branch
              %214 = sbr.rel (0) target = $region36
            $region35: #{model_forward.4} parent=27 // pred_region
              %s216 = ssub.s32 16, 1
              loop: start=0, step=1, limit=1
              $region37: #{model_forward.4} parent=35 // loop_pre_header
                _
              $region38: #{model_forward.4} parent=35 // loop_header
                %s218 = sphi 0, %s222
                %p219 = scmp.ge.s32.totalorder %s218, 1
                %s223 = sphi %s208, %s208
                %s224 = sphi %s204, %s204
              $region39: #{model_forward.4} parent=35 // loop_header_branch
                %221 = sbr.rel (%p219) target = $region43
              $region40: #{model_forward.4} parent=35 // loop_body
                %v225 = vld [vmem:[%s223] sm:%s216]
                %226 = vst [vmem:[%s224] sm:%s216] %v225
                %v227 = vld [vmem:[%s223 + $0x8] sm:%s216]
                %228 = vst [vmem:[%s224 + $0x4] sm:%s216] %v227
              $region41: #{model_forward.4} parent=35 // loop_footer
                %s222 = sadd.s32 1, %s218
              $region42: #{model_forward.4} parent=35 // loop_footer_branch
                %217 = sbr.rel target = $region38
              $region43: #{model_forward.4} parent=35 // loop_exit
                _
            $region36: #{model_forward.4} parent=27 // pred_fallthru
              _
          $region28: #{model_forward.4} parent=23 // pred_fallthru
            _
          %253 = vnop
        $region24: #{model_forward.4} parent=15 // pred_fallthru
          _
        // Predicated region
        $region62: #{model_forward.4} parent=15 // pred_check
          %p254 = pneg %p111
        $region63: #{model_forward.4} parent=15 // pred_check_branch
          %256 = sbr.rel (%p254) target = $region65
        $region64: #{model_forward.4} parent=15 // pred_region
          %s257 = sand.u32 %s101, 1
          %s258 = sand.u32 %s101, 1
          %s259 = smul.addr %s258, 8
          %s260 = scalar_lea.vmem [#allocation10], %s259
          %s261 = smul.addr %s30, 4
          %s262 = sadd.s32 %s31, %s261
          %s263 = smul.addr %s262, 4
          %s264 = scalar_lea.vmem %s4, %s263
          // Predicated region
          $region66: #{model_forward.4} parent=64 // pred_check
            _
          $region67: #{model_forward.4} parent=64 // pred_check_branch
            %266 = sbr.rel (0) target = $region69
          $region68: #{model_forward.4} parent=64 // pred_region
            // Predicated region
            $region70: #{model_forward.4} parent=68 // pred_check
              _
            $region71: #{model_forward.4} parent=68 // pred_check_branch
              %268 = sbr.rel target = $region73
            $region72: #{model_forward.4} parent=68 // pred_region
              // Predicated region
              $region85: #{model_forward.4} parent=72 // pred_check
                _
              $region86: #{model_forward.4} parent=72 // pred_check_branch
                %286 = sbr.rel (0) target = $region88
              $region87: #{model_forward.4} parent=72 // pred_region
                loop: start=0, step=1, limit=1
                $region89: #{model_forward.4} parent=87 // loop_pre_header
                  _
                $region90: #{model_forward.4} parent=87 // loop_header
                  %s288 = sphi 0, %s292
                  %p289 = scmp.ge.s32.totalorder %s288, 1
                  %s293 = sphi %s264, %s264
                  %s294 = sphi %s260, %s260
                $region91: #{model_forward.4} parent=87 // loop_header_branch
                  %291 = sbr.rel (%p289) target = $region95
                $region92: #{model_forward.4} parent=87 // loop_body
                  _
                $region93: #{model_forward.4} parent=87 // loop_footer
                  %s292 = sadd.s32 1, %s288
                $region94: #{model_forward.4} parent=87 // loop_footer_branch
                  %287 = sbr.rel target = $region90
                $region95: #{model_forward.4} parent=87 // loop_exit
                  _
                %s296 = ssub.s32 16, 1
                loop: start=0, step=1, limit=1
                $region96: #{model_forward.4} parent=87 // loop_pre_header
                  _
                $region97: #{model_forward.4} parent=87 // loop_header
                  %s298 = sphi 0, %s302
                  %p299 = scmp.ge.s32.totalorder %s298, 1
                  %s303 = sphi %s264, %s264
                  %s304 = sphi %s260, %s260
                $region98: #{model_forward.4} parent=87 // loop_header_branch
                  %301 = sbr.rel (%p299) target = $region102
                $region99: #{model_forward.4} parent=87 // loop_body
                  %v305 = vld [vmem:[%s303] sm:%s296]
                  %306 = vst [vmem:[%s304] sm:%s296] %v305
                  %v307 = vld [vmem:[%s303 + $0x8] sm:%s296]
                  %308 = vst [vmem:[%s304 + $0x4] sm:%s296] %v307
                $region100: #{model_forward.4} parent=87 // loop_footer
                  %s302 = sadd.s32 1, %s298
                $region101: #{model_forward.4} parent=87 // loop_footer_branch
                  %297 = sbr.rel target = $region97
                $region102: #{model_forward.4} parent=87 // loop_exit
                  _
              $region88: #{model_forward.4} parent=72 // pred_fallthru
                _
            $region73: #{model_forward.4} parent=68 // pred_fallthru
              _
            // Predicated region
            $region74: #{model_forward.4} parent=68 // pred_check
              _
            $region75: #{model_forward.4} parent=68 // pred_check_branch
              %270 = sbr.rel (0) target = $region77
            $region76: #{model_forward.4} parent=68 // pred_region
              %s272 = ssub.s32 16, 1
              loop: start=0, step=1, limit=1
              $region78: #{model_forward.4} parent=76 // loop_pre_header
                _
              $region79: #{model_forward.4} parent=76 // loop_header
                %s274 = sphi 0, %s278
                %p275 = scmp.ge.s32.totalorder %s274, 1
                %s279 = sphi %s264, %s264
                %s280 = sphi %s260, %s260
              $region80: #{model_forward.4} parent=76 // loop_header_branch
                %277 = sbr.rel (%p275) target = $region84
              $region81: #{model_forward.4} parent=76 // loop_body
                %v281 = vld [vmem:[%s279] sm:%s272]
                %282 = vst [vmem:[%s280] sm:%s272] %v281
                %v283 = vld [vmem:[%s279 + $0x8] sm:%s272]
                %284 = vst [vmem:[%s280 + $0x4] sm:%s272] %v283
              $region82: #{model_forward.4} parent=76 // loop_footer
                %s278 = sadd.s32 1, %s274
              $region83: #{model_forward.4} parent=76 // loop_footer_branch
                %273 = sbr.rel target = $region79
              $region84: #{model_forward.4} parent=76 // loop_exit
                _
            $region77: #{model_forward.4} parent=68 // pred_fallthru
              _
          $region69: #{model_forward.4} parent=64 // pred_fallthru
            _
          %309 = vnop
        $region65: #{model_forward.4} parent=15 // pred_fallthru
          _
      $region16: #{model_forward.4} parent=5 // pred_fallthru
        _
      %p310 = scmp.le.s32.totalorder 1, %s23
      %p311 = scmp.lt.s32.totalorder %s23, 5
      %p312 = pnand %p310, %p311
      %p313 = pneg %p312
      // Predicated region
      $region103: #{model_forward.4} parent=5 // pred_check
        _
      $region104: #{model_forward.4} parent=5 // pred_check_branch
        %315 = sbr.rel (%p312) target = $region106
      $region105: #{model_forward.4} parent=5 // pred_region
        %s316 = ssub.s32 %s23, 1
        %s317 = sand.u32 %s76, 1
        %s318 = sand.u32 %s76, 1
        %s319 = smul.addr %s318, 8
        %s320 = scalar_lea.vmem [#allocation9], %s319
        // Predicated region
        $region107: #{model_forward.4} parent=105 // pred_check
          %p321 = pneg %p89
        $region108: #{model_forward.4} parent=105 // pred_check_branch
          %323 = sbr.rel (%p321) target = $region110
        $region109: #{model_forward.4} parent=105 // pred_region
          _
        $region110: #{model_forward.4} parent=105 // pred_fallthru
          _
        %s324 = sand.u32 %s104, 1
        %s325 = sand.u32 %s104, 1
        %s326 = smul.addr %s325, 8
        %s327 = scalar_lea.vmem [#allocation10], %s326
        // Predicated region
        $region111: #{model_forward.4} parent=105 // pred_check
          %p328 = pneg %p117
        $region112: #{model_forward.4} parent=105 // pred_check_branch
          %330 = sbr.rel (%p328) target = $region114
        $region113: #{model_forward.4} parent=105 // pred_region
          _
        $region114: #{model_forward.4} parent=105 // pred_fallthru
          _
        %p331 = scmp.lt.s32.totalorder %s32, 1
        %s332 = scalar_select %p331, %s32, 1
        %s333 = smul.addr %s332, 2
        %s334 = smul.addr %s333, 4
        %s335 = scalar_lea.vmem %s2, %s334
        %p336 = pneg %p61
        %p337 = pneg %p58
        %s338 = sand.u32 %s76, 1
        %s339 = sand.u32 %s76, 1
        %s340 = smul.addr %s339, 8
        %s341 = scalar_lea.vmem [#allocation9], %s340
        %p342 = pneg %p89
        %p343 = pneg %p86
        %s344 = sand.u32 %s104, 1
        %s345 = sand.u32 %s104, 1
        %s346 = smul.addr %s345, 8
        %s347 = scalar_lea.vmem [#allocation10], %s346
        %p348 = pneg %p117
        %p349 = pneg %p114
        %p350 = pneg %p145
        %p351 = pneg %p142
        %s352 = sand.u32 %s132, 1
        %s353 = sand.u32 %s132, 1
        %s354 = smul.addr %s353, 8
        %s355 = scalar_lea.vmem [#allocation11], %s354
        %p356 = pneg %p171
        %p357 = pneg %p168
        %p358 = scmp.lt.s32.totalorder %s32, 1
        %s359 = scalar_select %p358, %s32, 1
        %s360 = scalar_lea.vmem %s6, %s359
        %p361 = scmp.lt.s32.totalorder %s32, 1
        %s362 = scalar_select %p361, %s32, 1
        %s363 = smul.addr %s362, 2
        %s364 = smul.addr %s363, 4
        %s365 = scalar_lea.vmem %s2, %s364
        %p366 = scmp.lt.s32.totalorder %s32, 1
        %s367 = scalar_select %p366, %s32, 1
        %s368 = scalar_lea.vmem %s6, %s367
        %s370 = sld [smem:[#allocation7 + %s32]]
        %s371 = sld [smem:[#allocation8 + %s32]]
        %p372 = scmp.eq.s32.totalorder %s33, 0
        // Predicated region
        $region115: #{model_forward.4} parent=105 // pred_check
          %p373 = pneg %p372
        $region116: #{model_forward.4} parent=105 // pred_check_branch
          %375 = sbr.rel (%p373) target = $region118
        $region117: #{model_forward.4} parent=105 // pred_region
          %vm376 = vcmask 7168
          %377 = vst.msk [vmem:[#allocation2] sm:$0xff] %vm376, 0.0
          %378 = vst.msk [vmem:[#allocation2 + $0x8] sm:$0xff] %vm376, 0.0
          %379 = vst.msk [vmem:[#allocation3] sm:$0xff] %vm376, 0.0
          %380 = vst.msk [vmem:[#allocation3 + $0x8] sm:$0xff] %vm376, 0.0
          %381 = vst.msk [vmem:[#allocation4] sm:$0xff] %vm376, 0.0
          %382 = vst.msk [vmem:[#allocation4 + $0x8] sm:$0xff] %vm376, 0.0
          %383 = vst.msk [vmem:[#allocation5] sm:$0xff] %vm376, 0.0
          %384 = vst.msk [vmem:[#allocation5 + $0x8] sm:$0xff] %vm376, 0.0
        $region118: #{model_forward.4} parent=105 // pred_fallthru
          _
        %v385 = vld [vmem:[%s365] sm:$0xf]
        %v386 = vld [vmem:[%s365 + $0x4] sm:$0xf]
        %v387 = vld [vmem:[%s320] sm:$0xf]
        %v388 = vld [vmem:[%s320 + $0x4] sm:$0xf]
        %v391 = vunpack.c.l.b16 %v385
        %v392 = vunpack.c.l.b16 %v386
        %v393 = vpack.c.b16 %v392, %v391
        %v396 = vunpack.c.l.b16 %v387
        %v397 = vunpack.c.l.b16 %v388
        %v398 = vpack.c.b16 %v397, %v396
        %vm400 = vcmask 130048
        %v402 = vsel %vm400, %v393, 0
        %404 = vmatprep.subr.bf16.mxu0 0
        %405 = vmatpush1.bf16.msra.mxu0 0
        %406 = vmatprep.subr.bf16.mxu0 0
        %407 = vmatpush1.bf16.msra.mxu0 0
        %408 = vmatprep.subr.bf16.mxu0 0
        %409 = vmatpush1.bf16.msra.mxu0 0
        %410 = vmatprep.subr.bf16.mxu0 0
        %411 = vmatpush1.bf16.msra.mxu0 0
        %412 = vmatprep.subr.bf16.mxu0 0
        %413 = vmatpush1.bf16.msra.mxu0 0
        %414 = vmatprep.subr.bf16.mxu0 0
        %415 = vmatpush1.bf16.msra.mxu0 0
        %416 = vmatprep.subr.bf16.mxu0 0
        %417 = vmatpush1.bf16.msra.mxu0 0
        %418 = vmatprep.subr.bf16.mxu0 0
        %419 = vmatpush1.bf16.msra.mxu0 %v398
        %420 = vmatprep.subr.bf16.mxu0 0
        %421 = vmatpush2.bf16.msra.mxu0 0
        %422 = vmatprep.subr.bf16.mxu0 0
        %423 = vmatpush2.bf16.msra.mxu0 0
        %424 = vmatprep.subr.bf16.mxu0 0
        %425 = vmatpush2.bf16.msra.mxu0 0
        %426 = vmatprep.subr.bf16.mxu0 0
        %427 = vmatpush2.bf16.msra.mxu0 0
        %428 = vmatprep.subr.bf16.mxu0 0
        %429 = vmatpush2.bf16.msra.mxu0 0
        %430 = vmatprep.subr.bf16.mxu0 0
        %431 = vmatpush2.bf16.msra.mxu0 0
        %432 = vmatprep.subr.bf16.mxu0 0
        %433 = vmatpush2.bf16.msra.mxu0 0
        %434 = vmatprep.subr.bf16.mxu0 0
        %435 = vmatpush2.bf16.msra.mxu0 0
        %436 = vmatprep.mubr.bf16.mxu0 0
        %437 = vmatmul.mubr.bf16.gmra.mxu0 %v402
        %v438 = vpop.f32.mrf.mxu0
        %v439 = vadd.f32 0.0, %v438
        %v440 = vpop.f32.mrf.mxu0
        %v441 = vpop.f32.mrf.mxu0
        %v442 = vadd.f32 0.0, %v441
        %v443 = vpop.f32.mrf.mxu0
        %444 = vdwg.mxu0
        %v445 = vlaneseq
        %v446 = vshrl.u32 %v445, 7
        %v447 = vadd.s32 %v446, 8
        %v448 = vstv %s370
        %vm449 = vcmp.lt.s32.totalorder %v446, %v448
        %vm450 = vcmp.lt.s32.totalorder %v447, %v448
        %v451 = vsel %vm449, 1, 0
        %v452 = vsel %vm450, 1, 0
        %v453 = vcvt.s32.f32 %v451
        %v454 = vcvt.s32.f32 %v452
        %vm455 = vcmp.eq.s32.totalorder %v451, 1
        %vm456 = vcmp.eq.s32.totalorder %v452, 1
        %v457 = vsel %vm455, %v439, 0.0
        %v458 = vsel %vm456, %v442, 0.0
        %v459 = vpack.c.bf16 %v458, %v457
        %v461 = vunpack.c.l.b16 %v459
        %v462 = vunpack.c.h.b16 %v459
        %v463 = vpack.c.b16 %v461, %v461
        %v464 = vpack.c.b16 %v462, %v462
        %467 = vst [vmem:[%s355] sm:$0xf] %v463
        %468 = vst [vmem:[%s355 + $0x4] sm:$0xf] %v464
        %v469 = vld [vmem:[%s327] sm:$0xf]
        %v470 = vld [vmem:[%s327 + $0x4] sm:$0xf]
        %v471 = vunpack.c.l.bf16 %v469
        %v472 = vunpack.c.l.bf16 %v470
        %v473 = vand.u32 2147483647, %v439
        %v474 = vand.u32 2147483647, %v442
        %v475 = vsub.f32 0.0, %v473
        %v476 = vsub.f32 0.0, %v474
        %v477 = vmul.f32 %v475, 1.442695
        %v478 = vpow.pop %v477
        %v479 = vmul.f32 %v476, 1.442695
        %v480 = vpow.pop %v479
        %v481 = vmax.f32 %v439, 0.0
        %v482 = vmax.f32 %v442, 0.0
        %v483 = vmul.f32 %v439, %v471
        %v484 = vmul.f32 %v442, %v472
        %v485 = vsub.f32 %v481, %v483
        %v486 = vsub.f32 %v482, %v484
        %v487 = vadd.f32 %v478, 1.0
        %v488 = vlog2.pop %v487
        %v489 = vmul.f32 %v488, 0.6931472
        %v490 = vmul.f32 -0.5, %v478
        %v491 = vadd.f32 %v490, 1.0
        %v492 = vmul.f32 %v491, %v478
        %v493 = vand.u32 2147483647, %v478
        %vm494 = vcmp.lt.f32.partialorder %v493, 0.0004427343
        %v495 = vsel %vm494, %v492, %v489
        %v496 = vadd.f32 %v480, 1.0
        %v497 = vlog2.pop %v496
        %v498 = vmul.f32 %v497, 0.6931472
        %v499 = vmul.f32 -0.5, %v480
        %v500 = vadd.f32 %v499, 1.0
        %v501 = vmul.f32 %v500, %v480
        %v502 = vand.u32 2147483647, %v480
        %vm503 = vcmp.lt.f32.partialorder %v502, 0.0004427343
        %v504 = vsel %vm503, %v501, %v498
        %v505 = vadd.f32 %v485, %v495
        %v506 = vadd.f32 %v486, %v504
        %v507 = vadd.f32 %v478, 1.0
        %v508 = vadd.f32 %v480, 1.0
        %v509 = vrcp.pop %v507
        %v510 = vmul.f32 1.0, %v509
        %v511 = vrcp.pop %v508
        %v512 = vmul.f32 1.0, %v511
        %vm513 = vcmp.ge.f32.partialorder %v439, 0.0
        %vm514 = vcmp.ge.f32.partialorder %v442, 0.0
        %v515 = vmul.f32 %v478, %v510
        %v516 = vmul.f32 %v480, %v512
        %v517 = vsel %vm513, %v510, %v515
        %v518 = vsel %vm514, %v512, %v516
        %v519 = vld [vmem:[#allocation2] sm:$0xff]
        %v520 = vld [vmem:[#allocation2 + $0x8] sm:$0xff]
        %521 = vadd.xlane.f32.xlu0 %v505
        %v522 = vpop.xlane.xlu0 %521
        %523 = vadd.xlane.f32.xlu0 %v506
        %v524 = vpop.xlane.xlu0 %523
        %v525 = vadd.f32 %v519, %v522
        %v526 = vadd.f32 %v520, %v524
        %vm527 = vcmask 7168
        %528 = vst.msk [vmem:[#allocation2] sm:$0xff] %vm527, %v525
        %529 = vst.msk [vmem:[#allocation2 + $0x8] sm:$0xff] %vm527, %v526
        %v530 = vld [vmem:[#allocation3] sm:$0xff]
        %v531 = vld [vmem:[#allocation3 + $0x8] sm:$0xff]
        %v532 = vmul.f32 %v517, %v471
        %v533 = vmul.f32 %v518, %v472
        %534 = vadd.xlane.f32.xlu0 %v532
        %v535 = vpop.xlane.xlu0 %534
        %536 = vadd.xlane.f32.xlu0 %v533
        %v537 = vpop.xlane.xlu0 %536
        %v538 = vadd.f32 %v530, %v535
        %v539 = vadd.f32 %v531, %v537
        %540 = vst.msk [vmem:[#allocation3] sm:$0xff] %vm527, %v538
        %541 = vst.msk [vmem:[#allocation3 + $0x8] sm:$0xff] %vm527, %v539
        %v542 = vld [vmem:[#allocation4] sm:$0xff]
        %v543 = vld [vmem:[#allocation4 + $0x8] sm:$0xff]
        %544 = vadd.xlane.f32.xlu0 %v517
        %v545 = vpop.xlane.xlu0 %544
        %546 = vadd.xlane.f32.xlu0 %v518
        %v547 = vpop.xlane.xlu0 %546
        %v548 = vadd.f32 %v542, %v545
        %v549 = vadd.f32 %v543, %v547
        %550 = vst.msk [vmem:[#allocation4] sm:$0xff] %vm527, %v548
        %551 = vst.msk [vmem:[#allocation4 + $0x8] sm:$0xff] %vm527, %v549
        %v552 = vld [vmem:[#allocation5] sm:$0xff]
        %v553 = vld [vmem:[#allocation5 + $0x8] sm:$0xff]
        %554 = vadd.xlane.f32.xlu0 %v471
        %v555 = vpop.xlane.xlu0 %554
        %556 = vadd.xlane.f32.xlu0 %v472
        %v557 = vpop.xlane.xlu0 %556
        %v558 = vadd.f32 %v552, %v555
        %v559 = vadd.f32 %v553, %v557
        %560 = vst.msk [vmem:[#allocation5] sm:$0xff] %vm527, %v558
        %561 = vst.msk [vmem:[#allocation5 + $0x8] sm:$0xff] %vm527, %v559
        %p562 = scmp.eq.s32.totalorder %s33, 1
        // Predicated region
        $region119: #{model_forward.4} parent=105 // pred_check
          %p563 = pneg %p562
        $region120: #{model_forward.4} parent=105 // pred_check_branch
          %565 = sbr.rel (%p563) target = $region122
        $region121: #{model_forward.4} parent=105 // pred_region
          %v566 = vld [vmem:[#allocation2] sm:$0xff]
          %v567 = vld [vmem:[#allocation2 + $0x8] sm:$0xff]
          %v568 = vmul.f32 %v566, 0.00390625
          %v569 = vmul.f32 %v567, 0.00390625
          %v570 = vld [vmem:[#allocation3] sm:$0xff]
          %v571 = vld [vmem:[#allocation3 + $0x8] sm:$0xff]
          %v572 = vrcp.pop 1000.0
          %v573 = vmul.f32 %v570, %v572
          %v574 = vmul.f32 %v571, %v572
          %v575 = vmul.f32 %v573, 2.0
          %v576 = vmul.f32 %v574, 2.0
          %v577 = vadd.f32 %v575, 1e-06
          %v578 = vadd.f32 %v576, 1e-06
          %v579 = vld [vmem:[#allocation4] sm:$0xff]
          %v580 = vld [vmem:[#allocation4 + $0x8] sm:$0xff]
          %v581 = vmul.f32 %v579, %v572
          %v582 = vmul.f32 %v580, %v572
          %v583 = vld [vmem:[#allocation5] sm:$0xff]
          %v584 = vld [vmem:[#allocation5 + $0x8] sm:$0xff]
          %v585 = vmul.f32 %v583, %v572
          %v586 = vmul.f32 %v584, %v572
          %v587 = vadd.f32 %v581, %v585
          %v588 = vadd.f32 %v582, %v586
          %v589 = vadd.f32 %v587, 1e-06
          %v590 = vadd.f32 %v588, 1e-06
          %v591 = vrcp.pop %v589
          %v592 = vmul.f32 %v577, %v591
          %v593 = vrcp.pop %v590
          %v594 = vmul.f32 %v578, %v593
          %v595 = vsub.f32 1.0, %v592
          %v596 = vsub.f32 1.0, %v594
          %v597 = vmul.f32 %v568, %v453
          %v598 = vmul.f32 %v569, %v454
          %v599 = vsel %vm527, %v597, 0.0
          %v600 = vsel %vm527, %v598, 0.0
          %v601 = vadd.f32 %v599, %v600
          %602 = vadd.xlane.f32.xlu0 %v601
          %v603 = vpop.xlane.xlu0 %602
          %v604 = vrot.slane %v603, 4
          %v605 = vadd.f32 %v603, %v604
          %v606 = vrot.slane %v605, 2
          %v607 = vadd.f32 %v605, %v606
          %v608 = vrot.slane %v607, 1
          %v609 = vadd.f32 %v607, %v608
          %s610 = vtos %v609
          %v611 = vmul.f32 %v595, %v453
          %v612 = vmul.f32 %v596, %v454
          %v613 = vsel %vm527, %v611, 0.0
          %v614 = vsel %vm527, %v612, 0.0
          %v615 = vadd.f32 %v613, %v614
          %616 = vadd.xlane.f32.xlu0 %v615
          %v617 = vpop.xlane.xlu0 %616
          %v618 = vrot.slane %v617, 4
          %v619 = vadd.f32 %v617, %v618
          %v620 = vrot.slane %v619, 2
          %v621 = vadd.f32 %v619, %v620
          %v622 = vrot.slane %v621, 1
          %v623 = vadd.f32 %v621, %v622
          %s624 = vtos %v623
          %s625 = scvt.s32.f32 %s370
          %s626 = sadd.f32 %s625, 1e-08
          %v627 = vstv %s626
          %v628 = vrcp.pop %v627
          %s629 = vtos %v628
          %s630 = smul.f32 %s625, %s629
          %p631 = scmp.eq.s32.totalorder %s371, %s370
          %s632 = scalar_select %p631, 1, 0
          %s633 = scvt.s32.f32 %s632
          %s634 = smul.f32 %s610, %s630
          %s635 = smul.f32 %s634, %s633
          %s636 = smul.f32 %s624, %s630
          %s637 = smul.f32 %s636, %s633
          %s638 = scalar_select %p631, %s625, 1.0
          %v639 = vlaneseq
          %v640 = vand.u32 %v639, 127
          %vm641 = vcmp.eq.s32.totalorder %v640, 0
          %vm642 = vcmp.eq.s32.totalorder %v640, 1
          %vm643 = vcmp.eq.s32.totalorder %v640, 2
          %v644 = vstv %s638
          %v645 = vsel %vm643, %v644, 0.0
          %v646 = vstv %s637
          %v647 = vsel %vm642, %v646, %v645
          %v648 = vstv %s635
          %v649 = vsel %vm641, %v648, %v647
          %650 = vst [vmem:[%s368] sm:$0x1] %v649
        $region122: #{model_forward.4} parent=105 // pred_fallthru
          _
        %s651 = sand.u32 %s132, 1
        %s652 = sand.u32 %s132, 1
        %s653 = smul.addr %s652, 8
        %s654 = scalar_lea.vmem [#allocation11], %s653
        %p655 = scmp.lt.s32.totalorder %s32, 1
        %s656 = scalar_select %p655, %s32, 1
        %s657 = scalar_lea.vmem %s6, %s656
        // Predicated region
        $region123: #{model_forward.4} parent=105 // pred_check
          %p658 = pneg %p142
        $region124: #{model_forward.4} parent=105 // pred_check_branch
          %660 = sbr.rel (%p658) target = $region126
        $region125: #{model_forward.4} parent=105 // pred_region
          %s661 = smul.addr %s32, 4
          %s662 = sadd.s32 %s33, %s661
          %s663 = smul.addr %s662, 4
          %s664 = scalar_lea.vmem %s5, %s663
          // Predicated region
          $region127: #{model_forward.4} parent=125 // pred_check
            _
          $region128: #{model_forward.4} parent=125 // pred_check_branch
            %666 = sbr.rel (0) target = $region130
          $region129: #{model_forward.4} parent=125 // pred_region
            // Predicated region
            $region131: #{model_forward.4} parent=129 // pred_check
              _
            $region132: #{model_forward.4} parent=129 // pred_check_branch
              %668 = sbr.rel target = $region134
            $region133: #{model_forward.4} parent=129 // pred_region
              // Predicated region
              $region146: #{model_forward.4} parent=133 // pred_check
                _
              $region147: #{model_forward.4} parent=133 // pred_check_branch
                %686 = sbr.rel (0) target = $region149
              $region148: #{model_forward.4} parent=133 // pred_region
                loop: start=0, step=1, limit=1
                $region150: #{model_forward.4} parent=148 // loop_pre_header
                  _
                $region151: #{model_forward.4} parent=148 // loop_header
                  %s688 = sphi 0, %s692
                  %p689 = scmp.ge.s32.totalorder %s688, 1
                  %s693 = sphi %s654, %s654
                  %s694 = sphi %s664, %s664
                $region152: #{model_forward.4} parent=148 // loop_header_branch
                  %691 = sbr.rel (%p689) target = $region156
                $region153: #{model_forward.4} parent=148 // loop_body
                  _
                $region154: #{model_forward.4} parent=148 // loop_footer
                  %s692 = sadd.s32 1, %s688
                $region155: #{model_forward.4} parent=148 // loop_footer_branch
                  %687 = sbr.rel target = $region151
                $region156: #{model_forward.4} parent=148 // loop_exit
                  _
                %s696 = ssub.s32 16, 1
                loop: start=0, step=1, limit=1
                $region157: #{model_forward.4} parent=148 // loop_pre_header
                  _
                $region158: #{model_forward.4} parent=148 // loop_header
                  %s698 = sphi 0, %s702
                  %p699 = scmp.ge.s32.totalorder %s698, 1
                  %s703 = sphi %s654, %s654
                  %s704 = sphi %s664, %s664
                $region159: #{model_forward.4} parent=148 // loop_header_branch
                  %701 = sbr.rel (%p699) target = $region163
                $region160: #{model_forward.4} parent=148 // loop_body
                  %v705 = vld [vmem:[%s703] sm:%s696]
                  %706 = vst [vmem:[%s704] sm:%s696] %v705
                  %v707 = vld [vmem:[%s703 + $0x4] sm:%s696]
                  %708 = vst [vmem:[%s704 + $0x8] sm:%s696] %v707
                $region161: #{model_forward.4} parent=148 // loop_footer
                  %s702 = sadd.s32 1, %s698
                $region162: #{model_forward.4} parent=148 // loop_footer_branch
                  %697 = sbr.rel target = $region158
                $region163: #{model_forward.4} parent=148 // loop_exit
                  _
              $region149: #{model_forward.4} parent=133 // pred_fallthru
                _
            $region134: #{model_forward.4} parent=129 // pred_fallthru
              _
            // Predicated region
            $region135: #{model_forward.4} parent=129 // pred_check
              _
            $region136: #{model_forward.4} parent=129 // pred_check_branch
              %670 = sbr.rel (0) target = $region138
            $region137: #{model_forward.4} parent=129 // pred_region
              %s672 = ssub.s32 16, 1
              loop: start=0, step=1, limit=1
              $region139: #{model_forward.4} parent=137 // loop_pre_header
                _
              $region140: #{model_forward.4} parent=137 // loop_header
                %s674 = sphi 0, %s678
                %p675 = scmp.ge.s32.totalorder %s674, 1
                %s679 = sphi %s654, %s654
                %s680 = sphi %s664, %s664
              $region141: #{model_forward.4} parent=137 // loop_header_branch
                %677 = sbr.rel (%p675) target = $region145
              $region142: #{model_forward.4} parent=137 // loop_body
                %v681 = vld [vmem:[%s679] sm:%s672]
                %682 = vst [vmem:[%s680] sm:%s672] %v681
                %v683 = vld [vmem:[%s679 + $0x4] sm:%s672]
                %684 = vst [vmem:[%s680 + $0x8] sm:%s672] %v683
              $region143: #{model_forward.4} parent=137 // loop_footer
                %s678 = sadd.s32 1, %s674
              $region144: #{model_forward.4} parent=137 // loop_footer_branch
                %673 = sbr.rel target = $region140
              $region145: #{model_forward.4} parent=137 // loop_exit
                _
            $region138: #{model_forward.4} parent=129 // pred_fallthru
              _
          $region130: #{model_forward.4} parent=125 // pred_fallthru
            _
          %709 = vnop
        $region126: #{model_forward.4} parent=105 // pred_fallthru
          _
        // Predicated region
        $region164: #{model_forward.4} parent=105 // pred_check
          %p710 = pneg %p168
        $region165: #{model_forward.4} parent=105 // pred_check_branch
          %712 = sbr.rel (%p710) target = $region167
        $region166: #{model_forward.4} parent=105 // pred_region
          _
        $region167: #{model_forward.4} parent=105 // pred_fallthru
          _
      $region106: #{model_forward.4} parent=5 // pred_fallthru
        _
      %p713 = scmp.le.s32.totalorder 2, %s23
      // Predicated region
      $region168: #{model_forward.4} parent=5 // pred_check
        %p714 = pneg %p713
      $region169: #{model_forward.4} parent=5 // pred_check_branch
        %716 = sbr.rel (%p714) target = $region171
      $region170: #{model_forward.4} parent=5 // pred_region
        %s717 = ssub.s32 %s23, 2
        // Predicated region
        $region172: #{model_forward.4} parent=170 // pred_check
          %p718 = pneg %p148
        $region173: #{model_forward.4} parent=170 // pred_check_branch
          %720 = sbr.rel (%p718) target = $region175
        $region174: #{model_forward.4} parent=170 // pred_region
          %s721 = sand.u32 %s133, 1
          %s722 = sand.u32 %s133, 1
          %s723 = smul.addr %s722, 8
          %s724 = scalar_lea.vmem [#allocation11], %s723
        $region175: #{model_forward.4} parent=170 // pred_fallthru
          _
        // Predicated region
        $region176: #{model_forward.4} parent=170 // pred_check
          %p725 = pneg %p174
        $region177: #{model_forward.4} parent=170 // pred_check_branch
          %727 = sbr.rel (%p725) target = $region179
        $region178: #{model_forward.4} parent=170 // pred_region
          %p728 = scmp.lt.s32.totalorder %s34, 1
          %s729 = scalar_select %p728, %s34, 1
          %s730 = scalar_lea.vmem %s6, %s729
        $region179: #{model_forward.4} parent=170 // pred_fallthru
          _
      $region171: #{model_forward.4} parent=5 // pred_fallthru
        _
    $region6: #{model_forward.4} parent=1 // loop_footer
      %s27 = sadd.s32 1, %s23
    $region7: #{model_forward.4} parent=1 // loop_footer_branch
      %22 = sbr.rel target = $region3
    $region8: #{model_forward.4} parent=1 // loop_exit
      _

</llo_original>
